<compile_context>
chip_gen: v6e
topology: v6e:2x2x1
jax: 0.10.0
libtpu: 0.0.40
codegen_flags: <defaults>
</compile_context>

<pallas_src>
import functools

import jax
import jax.numpy as jnp
from jax.experimental import pallas as pl
from jax.experimental.pallas import tpu as pltpu

BN_EPS = 1e-5
VOCAB_PAD = 128  # lane-clean per-position one-hot width


# ----------------------------------------------------------------------------
# Pallas kernel (single fused forward)
# ----------------------------------------------------------------------------
def _elu(y):
    # ELU(alpha=1); exp only sees the clamped (<=0) argument.
    # TODO(synk): switch to jnp.expm1 (better precision near 0) once its Mosaic
    # lowering is guaranteed; exp(y)-1 is used here for lowering safety.
    return jnp.where(y > 0.0, y, jnp.exp(jnp.minimum(y, 0.0)) - 1.0)


def fused_vae_kernel(idx_ref, eps_ref, *refs, n_enc, n_dec, latent, vocab_pad):
    """refs = [w_emb0(L*Vp,enc0) bf16, b_enc0,
               (w bf16, b) x (n_enc-1),
               w_fc12 bf16, b_fc12,
               (w bf16, b) x n_dec,          # dec0 has fc3 pre-folded in
               val_ref, ml_ref]."""
    param_refs = refs[:-2]
    val_ref, ml_ref = refs[-2:]
    it = iter(param_refs)

    Bb, L = idx_ref.shape
    f32 = jnp.float32
    bf16 = jnp.bfloat16

    # -- encoder layer 0: embedding gather as ONE block-diagonal one-hot matmul
    #    (embedding table + BN0 scale/shift pre-folded into w0/b0) --
    w0 = next(it)                       # (L*vocab_pad, enc0)  bf16
    b0 = next(it)                       # (1, enc0)            f32
    idx = idx_ref[...]                  # (Bb, L) int32
    iota = jax.lax.broadcasted_iota(jnp.int32, (Bb, vocab_pad), 1)
    pieces = [(idx[:, p:p + 1] == iota).astype(f32) for p in range(L)]
    onehot = jnp.concatenate(pieces, axis=1).astype(bf16)     # (Bb, L*Vp)
    y = jnp.dot(onehot, w0[...], preferred_element_type=f32) + b0[...]
    x = _elu(y)

    # -- remaining encoder layers (eval-mode BN folded into W/b) --
    for _ in range(n_enc - 1):
        w = next(it); b = next(it)
        x = _elu(jnp.dot(x.astype(bf16), w[...],
                         preferred_element_type=f32) + b[...])

    # -- bottleneck: merged fc1|fc2 matmul + fused reparameterization --
    w12 = next(it); b12 = next(it)
    ml = jnp.dot(x.astype(bf16), w12[...], preferred_element_type=f32) + b12[...]
    mu = ml[:, :latent]
    logvar = ml[:, latent:]
    z = mu + eps_ref[...] * jnp.exp(0.5 * logvar)

    # -- decoder layers (fc3 folded into layer 0; eval BN folded into W/b) --
    for _ in range(n_dec):
        w = next(it); b = next(it)
        z = _elu(jnp.dot(z.astype(bf16), w[...],
                         preferred_element_type=f32) + b[...])

    val_ref[...] = z                    # (Bb, dec_out_pad), lane-dense
    ml_ref[...] = ml                    # (Bb, 2*latent), single merged store


# ----------------------------------------------------------------------------
# Wrapper: one pallas_call for the whole forward, batch grid
# ----------------------------------------------------------------------------
def linear_vae_forward(idx, eps, flat, *, n_enc, n_dec, latent, vocab_pad,
                       dec_out, dec_out_pad):
    B, _ = idx.shape
    tile_b = B if B <= 128 else 128
    assert B % tile_b == 0, "toy wrapper assumes B divisible by the batch tile"
    grid = (B // tile_b,)

    def batched(shape):
        return pl.BlockSpec((tile_b, shape[1]), lambda i: (i, 0))

    def resident(shape):
        return pl.BlockSpec(shape, lambda i: (0,) * len(shape))

    kernel = functools.partial(
        fused_vae_kernel,
        n_enc=n_enc, n_dec=n_dec, latent=latent, vocab_pad=vocab_pad)

    out_shape = (
        jax.ShapeDtypeStruct((B, dec_out_pad), jnp.float32),   # val (padded)
        jax.ShapeDtypeStruct((B, 2 * latent), jnp.float32),    # [mu | logvar]
    )
    val_pad, ml = pl.pallas_call(
        kernel,
        grid=grid,
        out_shape=out_shape,
        in_specs=[batched(idx.shape), batched(eps.shape)]
                 + [resident(t.shape) for t in flat],
        out_specs=(batched((B, dec_out_pad)), batched((B, 2 * latent))),
        compiler_params=pltpu.CompilerParams(
            dimension_semantics=("parallel",),
            vmem_limit_bytes=32 * 1024 * 1024),
    )(idx, eps, *flat)

    val = val_pad[:, :dec_out]
    mu = ml[:, :latent]
    logvar = ml[:, latent:]
    return val.reshape(B, 23, -1), mu, logvar


# ----------------------------------------------------------------------------
# Parameter construction (deterministic, synthetic) and folding
# ----------------------------------------------------------------------------
def make_bn_params(key, n):
    k1, k2, k3, k4 = jax.random.split(key, 4)
    gamma = 1.0 + 0.1 * jax.random.normal(k1, (n,), jnp.float32)
    beta = 0.1 * jax.random.normal(k2, (n,), jnp.float32)
    running_mean = 0.1 * jax.random.normal(k3, (n,), jnp.float32)
    running_var = jax.random.uniform(k4, (n,), jnp.float32, 0.5, 1.5)
    scale = gamma / jnp.sqrt(running_var + BN_EPS)   # eval-mode BN
    shift = beta - running_mean * scale
    return scale, shift


def make_linear_params(key, fin, fout):
    k1, k2 = jax.random.split(key)
    w = 0.05 * jax.random.normal(k1, (fin, fout), jnp.float32)
    b = 0.05 * jax.random.normal(k2, (fout,), jnp.float32)
    return w, b


def make_bn_linear_stack(key, dims):
    layers = []
    for i in range(len(dims) - 1):
        key, kb, kl = jax.random.split(key, 3)
        scale, shift = make_bn_params(kb, dims[i])
        w, b = make_linear_params(kl, dims[i], dims[i + 1])
        layers.append((scale, shift, w, b))
    return layers


def fold_bn_into_linear(scale, shift, w, b):
    """(x*scale + shift) @ W + b  ==  x @ W' + b'."""
    return w * scale[:, None], (b + shift @ w).reshape(1, -1)


def fold_embedding_into_first_layer(emb, scale, shift, w, b, data_length,
                                    vocab_pad=VOCAB_PAD):
    """Fold BN0 + embedding table into ONE block-diagonal (L*Vp, enc0) matrix."""
    vocab, e = emb.shape
    assert vocab <= vocab_pad
    w_bn = w * scale[:, None]
    b_f = (b + shift @ w).reshape(1, -1)
    blocks = []
    for p in range(data_length):
        blk = emb @ w_bn[p * e:(p + 1) * e, :]                 # (vocab, enc0)
        blocks.append(jnp.pad(blk, ((0, vocab_pad - vocab), (0, 0))))
    w_flat = jnp.concatenate(blocks, axis=0)                   # (L*Vp, enc0)
    return w_flat, b_f, vocab_pad


def build_kernel_params(raw, data_length):
    enc, dec = raw["encoder"], raw["decoder"]
    bf16 = jnp.bfloat16
    flat = []

    # encoder layer 0: embedding + BN0 folded, block-diagonal stacked.
    s0, h0, w0, b0 = enc[0]
    w_stack, b_f, vocab_pad = fold_embedding_into_first_layer(
        raw["emb"], s0, h0, w0, b0, data_length)
    flat += [w_stack.astype(bf16), b_f]

    for (scale, shift, w, b) in enc[1:]:
        wf, bf = fold_bn_into_linear(scale, shift, w, b)
        flat += [wf.astype(bf16), bf]

    # merged fc1 | fc2
    w1, b1 = raw["fc1"]
    w2, b2 = raw["fc2"]
    flat += [jnp.concatenate([w1, w2], axis=1).astype(bf16),
             jnp.concatenate([b1, b2]).reshape(1, -1)]

    # fc3 folded into (BN-folded) decoder layer 0 (exact: no nonlinearity).
    w3, b3 = raw["fc3"]
    sd0, hd0, wd0, bd0 = dec[0]
    wd0_f, bd0_f = fold_bn_into_linear(sd0, hd0, wd0, bd0)
    w_comb = w3 @ wd0_f                                        # (latent, d0)
    b_comb = (b3.reshape(1, -1) @ wd0_f) + bd0_f               # (1, d0)
    flat += [w_comb.astype(bf16), b_comb]

    # remaining decoder layers; pad last layer's output lanes to a 128 multiple.
    dec_out = dec[-1][2].shape[1]
    dec_out_pad = -(-dec_out // 128) * 128
    rest = dec[1:]
    for li, (scale, shift, w, b) in enumerate(rest):
        wf, bf = fold_bn_into_linear(scale, shift, w, b)
        if li == len(rest) - 1 and dec_out_pad != dec_out:
            pad = dec_out_pad - dec_out
            wf = jnp.pad(wf, ((0, 0), (0, pad)))
            bf = jnp.pad(bf, ((0, 0), (0, pad)))
        flat += [wf.astype(bf16), bf]

    return {
        "flat": flat,
        "n_enc": len(enc),
        "n_dec": len(dec),
        "latent": raw["fc1"][0].shape[1],
        "vocab_pad": vocab_pad,
        "dec_out": dec_out,
        "dec_out_pad": dec_out_pad,
    }


# ----------------------------------------------------------------------------
# Plain-JAX reference (from the UN-folded f32 parameters) for validation
# ----------------------------------------------------------------------------
def _elu_ref(y):
    return jnp.where(y > 0.0, y, jnp.expm1(jnp.minimum(y, 0.0)))


def reference_forward(idx, eps, raw):
    B = idx.shape[0]
    x = jnp.take(raw["emb"], idx, axis=0).reshape(B, -1)
    for (scale, shift, w, b) in raw["encoder"]:
        x = _elu_ref((x * scale + shift) @ w + b)
    mu = x @ raw["fc1"][0] + raw["fc1"][1]
    logvar = x @ raw["fc2"][0] + raw["fc2"][1]
    z = mu + eps * jnp.exp(0.5 * logvar)
    z = z @ raw["fc3"][0] + raw["fc3"][1]
    for (scale, shift, w, b) in raw["decoder"]:
        z = _elu_ref((z * scale + shift) @ w + b)
    return z.reshape(B, 23, -1), mu, logvar


# ----------------------------------------------------------------------------
# Main
# ----------------------------------------------------------------------------
if __name__ == "__main__":
    # Small synthetic config
    B = 8                  # batch
    L = 8                  # data_length
    VOCAB = 23             # embeddings_static.shape[0]
    E = 16                 # embeddings_static.shape[1]
    HIDDEN = 64            # hidden_size
    LATENT = 32            # embedding_size (latent dim)
    ENC_SIZES = [32, 24, 16]            # encoder_sizes
    DEC_SIZES = [23, 16, 24, 32]        # decoder_sizes (dec[0]=23 -> view(B,23,-1) exact)

    key = jax.random.PRNGKey(0)
    keys = jax.random.split(key, 10)

    # Static embedding table with max_norm=1 renormalization.
    # NOTE(eval-only assumption): PyTorch renorms at lookup time in-place; with
    # a frozen table in eval this is equivalent to renorming the table once.
    emb = jax.random.normal(keys[0], (VOCAB, E), jnp.float32)
    norms = jnp.linalg.norm(emb, axis=1, keepdims=True)
    emb = emb * jnp.minimum(1.0, 1.0 / jnp.maximum(norms, 1e-7))

    enc_dims = [E * L, ENC_SIZES[0] * L, ENC_SIZES[1] * L, ENC_SIZES[2] * L, HIDDEN]
    dec_dims = [HIDDEN, DEC_SIZES[3] * L, DEC_SIZES[2] * L, DEC_SIZES[1] * L,
                DEC_SIZES[0] * L]

    raw = {
        "emb": emb,
        "encoder": make_bn_linear_stack(keys[1], enc_dims),
        "decoder": make_bn_linear_stack(keys[2], dec_dims),
        "fc1": make_linear_params(keys[3], HIDDEN, LATENT),
        "fc2": make_linear_params(keys[4], HIDDEN, LATENT),
        "fc3": make_linear_params(keys[5], LATENT, HIDDEN),
    }
    kp = build_kernel_params(raw, L)

    # Integer token inputs (B, data_length) and the reparameterization noise.
    idx = jax.random.randint(keys[6], (B, L), 0, VOCAB, dtype=jnp.int32)
    eps = jax.random.normal(keys[7], (B, LATENT), jnp.float32)

    fwd = jax.jit(functools.partial(
        linear_vae_forward,
        n_enc=kp["n_enc"], n_dec=kp["n_dec"], latent=kp["latent"],
        vocab_pad=kp["vocab_pad"], dec_out=kp["dec_out"],
        dec_out_pad=kp["dec_out_pad"]))

    val, mu, logvar = fwd(idx, eps, kp["flat"])
    jax.block_until_ready((val, mu, logvar))

    # Shape / sanity checks.
    assert val.shape == (B, 23, (DEC_SIZES[0] * L) // 23)
    assert mu.shape == (B, LATENT) and logvar.shape == (B, LATENT)
    assert bool(jnp.all(jnp.isfinite(val))) and bool(jnp.all(jnp.isfinite(mu)))

    # Validate the fused (bf16-weight) kernel against an unfolded f32 reference.
    val_r, mu_r, lv_r = reference_forward(idx, eps, raw)
    assert jnp.allclose(mu, mu_r, rtol=3e-2, atol=3e-2), "mu mismatch"
    assert jnp.allclose(logvar, lv_r, rtol=3e-2, atol=3e-2), "logvar mismatch"
    assert jnp.allclose(val, val_r, rtol=3e-2, atol=3e-2), "val mismatch"

    print("KERNEL_OK")
</pallas_src>

<mosaic_0001>
module attributes {stable_mosaic.version = 11 : i64} {
  func.func @fused_vae_kernel(%arg0: i32, %arg1: memref<8x8xi32, #tpu.memory_space<vmem>>, %arg2: memref<8x32xf32, #tpu.memory_space<vmem>>, %arg3: memref<1024x256xbf16, #tpu.memory_space<vmem>>, %arg4: memref<1x256xf32, #tpu.memory_space<vmem>>, %arg5: memref<256x192xbf16, #tpu.memory_space<vmem>>, %arg6: memref<1x192xf32, #tpu.memory_space<vmem>>, %arg7: memref<192x128xbf16, #tpu.memory_space<vmem>>, %arg8: memref<1x128xf32, #tpu.memory_space<vmem>>, %arg9: memref<128x64xbf16, #tpu.memory_space<vmem>>, %arg10: memref<1x64xf32, #tpu.memory_space<vmem>>, %arg11: memref<64x64xbf16, #tpu.memory_space<vmem>>, %arg12: memref<1x64xf32, #tpu.memory_space<vmem>>, %arg13: memref<32x256xbf16, #tpu.memory_space<vmem>>, %arg14: memref<1x256xf32, #tpu.memory_space<vmem>>, %arg15: memref<256x192xbf16, #tpu.memory_space<vmem>>, %arg16: memref<1x192xf32, #tpu.memory_space<vmem>>, %arg17: memref<192x128xbf16, #tpu.memory_space<vmem>>, %arg18: memref<1x128xf32, #tpu.memory_space<vmem>>, %arg19: memref<128x256xbf16, #tpu.memory_space<vmem>>, %arg20: memref<1x256xf32, #tpu.memory_space<vmem>>, %arg21: memref<8x256xf32, #tpu.memory_space<vmem>>, %arg22: memref<8x64xf32, #tpu.memory_space<vmem>>) attributes {dimension_semantics = [#tpu.dimension_semantics<parallel>], iteration_bounds = array<i64: 1>, scalar_prefetch = 0 : i64, scratch_operands = 0 : i64, tpu.core_type = #tpu.core_type<tc>, window_params = [{transform_indices = @transform_0, window_bounds = array<i64: 8, 8>}, {transform_indices = @transform_1, window_bounds = array<i64: 8, 32>}, {pipeline_mode = #tpu.pipeline_mode<synchronous>, transform_indices = @transform_2, window_bounds = array<i64: 1024, 256>}, {pipeline_mode = #tpu.pipeline_mode<synchronous>, transform_indices = @transform_3, window_bounds = array<i64: 1, 256>}, {pipeline_mode = #tpu.pipeline_mode<synchronous>, transform_indices = @transform_4, window_bounds = array<i64: 256, 192>}, {pipeline_mode = #tpu.pipeline_mode<synchronous>, transform_indices = @transform_5, window_bounds = array<i64: 1, 192>}, {pipeline_mode = #tpu.pipeline_mode<synchronous>, transform_indices = @transform_6, window_bounds = array<i64: 192, 128>}, {pipeline_mode = #tpu.pipeline_mode<synchronous>, transform_indices = @transform_7, window_bounds = array<i64: 1, 128>}, {pipeline_mode = #tpu.pipeline_mode<synchronous>, transform_indices = @transform_8, window_bounds = array<i64: 128, 64>}, {pipeline_mode = #tpu.pipeline_mode<synchronous>, transform_indices = @transform_9, window_bounds = array<i64: 1, 64>}, {pipeline_mode = #tpu.pipeline_mode<synchronous>, transform_indices = @transform_10, window_bounds = array<i64: 64, 64>}, {pipeline_mode = #tpu.pipeline_mode<synchronous>, transform_indices = @transform_11, window_bounds = array<i64: 1, 64>}, {pipeline_mode = #tpu.pipeline_mode<synchronous>, transform_indices = @transform_12, window_bounds = array<i64: 32, 256>}, {pipeline_mode = #tpu.pipeline_mode<synchronous>, transform_indices = @transform_13, window_bounds = array<i64: 1, 256>}, {pipeline_mode = #tpu.pipeline_mode<synchronous>, transform_indices = @transform_14, window_bounds = array<i64: 256, 192>}, {pipeline_mode = #tpu.pipeline_mode<synchronous>, transform_indices = @transform_15, window_bounds = array<i64: 1, 192>}, {pipeline_mode = #tpu.pipeline_mode<synchronous>, transform_indices = @transform_16, window_bounds = array<i64: 192, 128>}, {pipeline_mode = #tpu.pipeline_mode<synchronous>, transform_indices = @transform_17, window_bounds = array<i64: 1, 128>}, {pipeline_mode = #tpu.pipeline_mode<synchronous>, transform_indices = @transform_18, window_bounds = array<i64: 128, 256>}, {pipeline_mode = #tpu.pipeline_mode<synchronous>, transform_indices = @transform_19, window_bounds = array<i64: 1, 256>}, {transform_indices = @transform_20, window_bounds = array<i64: 8, 256>}, {transform_indices = @transform_21, window_bounds = array<i64: 8, 64>}]} {
    %c0 = arith.constant 0 : index
    %c0_0 = arith.constant 0 : index
    %0 = vector.load %arg1[%c0, %c0_0] : memref<8x8xi32, #tpu.memory_space<vmem>>, vector<8x8xi32>
    %1 = tpu.iota {dimensions = array<i32: 1>} : vector<8x128xi32>
    %2 = vector.extract_strided_slice %0 {offsets = [0, 0], sizes = [8, 1], strides = [1, 1]} : vector<8x8xi32> to vector<8x1xi32>
    %3 = vector.broadcast %2 : vector<8x1xi32> to vector<8x128xi32>
    %4 = arith.cmpi eq, %3, %1 : vector<8x128xi32>
    %5 = arith.extui %4 : vector<8x128xi1> to vector<8x128xi32>
    %6 = arith.sitofp %5 : vector<8x128xi32> to vector<8x128xf32>
    %7 = vector.extract_strided_slice %0 {offsets = [0, 1], sizes = [8, 1], strides = [1, 1]} : vector<8x8xi32> to vector<8x1xi32>
    %8 = vector.broadcast %7 : vector<8x1xi32> to vector<8x128xi32>
    %9 = arith.cmpi eq, %8, %1 : vector<8x128xi32>
    %10 = arith.extui %9 : vector<8x128xi1> to vector<8x128xi32>
    %11 = arith.sitofp %10 : vector<8x128xi32> to vector<8x128xf32>
    %12 = vector.extract_strided_slice %0 {offsets = [0, 2], sizes = [8, 1], strides = [1, 1]} : vector<8x8xi32> to vector<8x1xi32>
    %13 = vector.broadcast %12 : vector<8x1xi32> to vector<8x128xi32>
    %14 = arith.cmpi eq, %13, %1 : vector<8x128xi32>
    %15 = arith.extui %14 : vector<8x128xi1> to vector<8x128xi32>
    %16 = arith.sitofp %15 : vector<8x128xi32> to vector<8x128xf32>
    %17 = vector.extract_strided_slice %0 {offsets = [0, 3], sizes = [8, 1], strides = [1, 1]} : vector<8x8xi32> to vector<8x1xi32>
    %18 = vector.broadcast %17 : vector<8x1xi32> to vector<8x128xi32>
    %19 = arith.cmpi eq, %18, %1 : vector<8x128xi32>
    %20 = arith.extui %19 : vector<8x128xi1> to vector<8x128xi32>
    %21 = arith.sitofp %20 : vector<8x128xi32> to vector<8x128xf32>
    %22 = vector.extract_strided_slice %0 {offsets = [0, 4], sizes = [8, 1], strides = [1, 1]} : vector<8x8xi32> to vector<8x1xi32>
    %23 = vector.broadcast %22 : vector<8x1xi32> to vector<8x128xi32>
    %24 = arith.cmpi eq, %23, %1 : vector<8x128xi32>
    %25 = arith.extui %24 : vector<8x128xi1> to vector<8x128xi32>
    %26 = arith.sitofp %25 : vector<8x128xi32> to vector<8x128xf32>
    %27 = vector.extract_strided_slice %0 {offsets = [0, 5], sizes = [8, 1], strides = [1, 1]} : vector<8x8xi32> to vector<8x1xi32>
    %28 = vector.broadcast %27 : vector<8x1xi32> to vector<8x128xi32>
    %29 = arith.cmpi eq, %28, %1 : vector<8x128xi32>
    %30 = arith.extui %29 : vector<8x128xi1> to vector<8x128xi32>
    %31 = arith.sitofp %30 : vector<8x128xi32> to vector<8x128xf32>
    %32 = vector.extract_strided_slice %0 {offsets = [0, 6], sizes = [8, 1], strides = [1, 1]} : vector<8x8xi32> to vector<8x1xi32>
    %33 = vector.broadcast %32 : vector<8x1xi32> to vector<8x128xi32>
    %34 = arith.cmpi eq, %33, %1 : vector<8x128xi32>
    %35 = arith.extui %34 : vector<8x128xi1> to vector<8x128xi32>
    %36 = arith.sitofp %35 : vector<8x128xi32> to vector<8x128xf32>
    %37 = vector.extract_strided_slice %0 {offsets = [0, 7], sizes = [8, 1], strides = [1, 1]} : vector<8x8xi32> to vector<8x1xi32>
    %38 = vector.broadcast %37 : vector<8x1xi32> to vector<8x128xi32>
    %39 = arith.cmpi eq, %38, %1 : vector<8x128xi32>
    %40 = arith.extui %39 : vector<8x128xi1> to vector<8x128xi32>
    %41 = arith.sitofp %40 : vector<8x128xi32> to vector<8x128xf32>
    %42 = tpu.concatenate %6, %11, %16, %21, %26, %31, %36, %41 in 1 : vector<8x128xf32>, vector<8x128xf32>, vector<8x128xf32>, vector<8x128xf32>, vector<8x128xf32>, vector<8x128xf32>, vector<8x128xf32>, vector<8x128xf32> -> vector<8x1024xf32>
    %43 = arith.truncf %42 : vector<8x1024xf32> to vector<8x1024xbf16>
    %c0_1 = arith.constant 0 : index
    %c0_2 = arith.constant 0 : index
    %44 = vector.load %arg3[%c0_1, %c0_2] : memref<1024x256xbf16, #tpu.memory_space<vmem>>, vector<1024x256xbf16>
    %cst = arith.constant dense<0.000000e+00> : vector<8x256xf32>
    %45 = tpu.matmul %43, %44, %cst {dimension_numbers = #tpu.dot_dimension_numbers<[1], [0], [0], [1], [0, 0, 1, 1], [], []>} : vector<8x1024xbf16>, vector<1024x256xbf16>, vector<8x256xf32> -> vector<8x256xf32>
    %c0_3 = arith.constant 0 : index
    %c0_4 = arith.constant 0 : index
    %46 = vector.load %arg4[%c0_3, %c0_4] : memref<1x256xf32, #tpu.memory_space<vmem>>, vector<1x256xf32>
    %47 = vector.broadcast %46 : vector<1x256xf32> to vector<8x256xf32>
    %48 = arith.addf %45, %47 : vector<8x256xf32>
    %cst_5 = arith.constant 0.000000e+00 : f32
    %49 = vector.broadcast %cst_5 : f32 to vector<8x256xf32>
    %50 = arith.cmpf ogt, %48, %49 : vector<8x256xf32>
    %cst_6 = arith.constant 0.000000e+00 : f32
    %51 = vector.broadcast %cst_6 : f32 to vector<8x256xf32>
    %52 = arith.minimumf %48, %51 : vector<8x256xf32>
    %53 = math.exp %52 : vector<8x256xf32>
    %cst_7 = arith.constant 1.000000e+00 : f32
    %54 = vector.broadcast %cst_7 : f32 to vector<8x256xf32>
    %55 = arith.subf %53, %54 : vector<8x256xf32>
    %56 = arith.select %50, %48, %55 : vector<8x256xi1>, vector<8x256xf32>
    %57 = arith.truncf %56 : vector<8x256xf32> to vector<8x256xbf16>
    %c0_8 = arith.constant 0 : index
    %c0_9 = arith.constant 0 : index
    %58 = vector.load %arg5[%c0_8, %c0_9] : memref<256x192xbf16, #tpu.memory_space<vmem>>, vector<256x192xbf16>
    %cst_10 = arith.constant dense<0.000000e+00> : vector<8x192xf32>
    %59 = tpu.matmul %57, %58, %cst_10 {dimension_numbers = #tpu.dot_dimension_numbers<[1], [0], [0], [1], [0, 0, 1, 1], [], []>} : vector<8x256xbf16>, vector<256x192xbf16>, vector<8x192xf32> -> vector<8x192xf32>
    %c0_11 = arith.constant 0 : index
    %c0_12 = arith.constant 0 : index
    %60 = vector.load %arg6[%c0_11, %c0_12] : memref<1x192xf32, #tpu.memory_space<vmem>>, vector<1x192xf32>
    %61 = vector.broadcast %60 : vector<1x192xf32> to vector<8x192xf32>
    %62 = arith.addf %59, %61 : vector<8x192xf32>
    %cst_13 = arith.constant 0.000000e+00 : f32
    %63 = vector.broadcast %cst_13 : f32 to vector<8x192xf32>
    %64 = arith.cmpf ogt, %62, %63 : vector<8x192xf32>
    %cst_14 = arith.constant 0.000000e+00 : f32
    %65 = vector.broadcast %cst_14 : f32 to vector<8x192xf32>
    %66 = arith.minimumf %62, %65 : vector<8x192xf32>
    %67 = math.exp %66 : vector<8x192xf32>
    %cst_15 = arith.constant 1.000000e+00 : f32
    %68 = vector.broadcast %cst_15 : f32 to vector<8x192xf32>
    %69 = arith.subf %67, %68 : vector<8x192xf32>
    %70 = arith.select %64, %62, %69 : vector<8x192xi1>, vector<8x192xf32>
    %71 = arith.truncf %70 : vector<8x192xf32> to vector<8x192xbf16>
    %c0_16 = arith.constant 0 : index
    %c0_17 = arith.constant 0 : index
    %72 = vector.load %arg7[%c0_16, %c0_17] : memref<192x128xbf16, #tpu.memory_space<vmem>>, vector<192x128xbf16>
    %cst_18 = arith.constant dense<0.000000e+00> : vector<8x128xf32>
    %73 = tpu.matmul %71, %72, %cst_18 {dimension_numbers = #tpu.dot_dimension_numbers<[1], [0], [0], [1], [0, 0, 1, 1], [], []>} : vector<8x192xbf16>, vector<192x128xbf16>, vector<8x128xf32> -> vector<8x128xf32>
    %c0_19 = arith.constant 0 : index
    %c0_20 = arith.constant 0 : index
    %74 = vector.load %arg8[%c0_19, %c0_20] : memref<1x128xf32, #tpu.memory_space<vmem>>, vector<1x128xf32>
    %75 = vector.broadcast %74 : vector<1x128xf32> to vector<8x128xf32>
    %76 = arith.addf %73, %75 : vector<8x128xf32>
    %cst_21 = arith.constant 0.000000e+00 : f32
    %77 = vector.broadcast %cst_21 : f32 to vector<8x128xf32>
    %78 = arith.cmpf ogt, %76, %77 : vector<8x128xf32>
    %cst_22 = arith.constant 0.000000e+00 : f32
    %79 = vector.broadcast %cst_22 : f32 to vector<8x128xf32>
    %80 = arith.minimumf %76, %79 : vector<8x128xf32>
    %81 = math.exp %80 : vector<8x128xf32>
    %cst_23 = arith.constant 1.000000e+00 : f32
    %82 = vector.broadcast %cst_23 : f32 to vector<8x128xf32>
    %83 = arith.subf %81, %82 : vector<8x128xf32>
    %84 = arith.select %78, %76, %83 : vector<8x128xi1>, vector<8x128xf32>
    %85 = arith.truncf %84 : vector<8x128xf32> to vector<8x128xbf16>
    %c0_24 = arith.constant 0 : index
    %c0_25 = arith.constant 0 : index
    %86 = vector.load %arg9[%c0_24, %c0_25] : memref<128x64xbf16, #tpu.memory_space<vmem>>, vector<128x64xbf16>
    %cst_26 = arith.constant dense<0.000000e+00> : vector<8x64xf32>
    %87 = tpu.matmul %85, %86, %cst_26 {dimension_numbers = #tpu.dot_dimension_numbers<[1], [0], [0], [1], [0, 0, 1, 1], [], []>} : vector<8x128xbf16>, vector<128x64xbf16>, vector<8x64xf32> -> vector<8x64xf32>
    %c0_27 = arith.constant 0 : index
    %c0_28 = arith.constant 0 : index
    %88 = vector.load %arg10[%c0_27, %c0_28] : memref<1x64xf32, #tpu.memory_space<vmem>>, vector<1x64xf32>
    %89 = vector.broadcast %88 : vector<1x64xf32> to vector<8x64xf32>
    %90 = arith.addf %87, %89 : vector<8x64xf32>
    %cst_29 = arith.constant 0.000000e+00 : f32
    %91 = vector.broadcast %cst_29 : f32 to vector<8x64xf32>
    %92 = arith.cmpf ogt, %90, %91 : vector<8x64xf32>
    %cst_30 = arith.constant 0.000000e+00 : f32
    %93 = vector.broadcast %cst_30 : f32 to vector<8x64xf32>
    %94 = arith.minimumf %90, %93 : vector<8x64xf32>
    %95 = math.exp %94 : vector<8x64xf32>
    %cst_31 = arith.constant 1.000000e+00 : f32
    %96 = vector.broadcast %cst_31 : f32 to vector<8x64xf32>
    %97 = arith.subf %95, %96 : vector<8x64xf32>
    %98 = arith.select %92, %90, %97 : vector<8x64xi1>, vector<8x64xf32>
    %99 = arith.truncf %98 : vector<8x64xf32> to vector<8x64xbf16>
    %c0_32 = arith.constant 0 : index
    %c0_33 = arith.constant 0 : index
    %100 = vector.load %arg11[%c0_32, %c0_33] : memref<64x64xbf16, #tpu.memory_space<vmem>>, vector<64x64xbf16>
    %cst_34 = arith.constant dense<0.000000e+00> : vector<8x64xf32>
    %101 = tpu.matmul %99, %100, %cst_34 {dimension_numbers = #tpu.dot_dimension_numbers<[1], [0], [0], [1], [0, 0, 1, 1], [], []>} : vector<8x64xbf16>, vector<64x64xbf16>, vector<8x64xf32> -> vector<8x64xf32>
    %c0_35 = arith.constant 0 : index
    %c0_36 = arith.constant 0 : index
    %102 = vector.load %arg12[%c0_35, %c0_36] : memref<1x64xf32, #tpu.memory_space<vmem>>, vector<1x64xf32>
    %103 = vector.broadcast %102 : vector<1x64xf32> to vector<8x64xf32>
    %104 = arith.addf %101, %103 : vector<8x64xf32>
    %105 = vector.extract_strided_slice %104 {offsets = [0, 0], sizes = [8, 32], strides = [1, 1]} : vector<8x64xf32> to vector<8x32xf32>
    %106 = vector.extract_strided_slice %104 {offsets = [0, 32], sizes = [8, 32], strides = [1, 1]} : vector<8x64xf32> to vector<8x32xf32>
    %c0_37 = arith.constant 0 : index
    %c0_38 = arith.constant 0 : index
    %107 = vector.load %arg2[%c0_37, %c0_38] : memref<8x32xf32, #tpu.memory_space<vmem>>, vector<8x32xf32>
    %cst_39 = arith.constant 5.000000e-01 : f32
    %108 = vector.broadcast %cst_39 : f32 to vector<8x32xf32>
    %109 = arith.mulf %108, %106 : vector<8x32xf32>
    %110 = math.exp %109 : vector<8x32xf32>
    %111 = arith.mulf %107, %110 : vector<8x32xf32>
    %112 = arith.addf %105, %111 : vector<8x32xf32>
    %113 = arith.truncf %112 : vector<8x32xf32> to vector<8x32xbf16>
    %c0_40 = arith.constant 0 : index
    %c0_41 = arith.constant 0 : index
    %114 = vector.load %arg13[%c0_40, %c0_41] : memref<32x256xbf16, #tpu.memory_space<vmem>>, vector<32x256xbf16>
    %cst_42 = arith.constant dense<0.000000e+00> : vector<8x256xf32>
    %115 = tpu.matmul %113, %114, %cst_42 {dimension_numbers = #tpu.dot_dimension_numbers<[1], [0], [0], [1], [0, 0, 1, 1], [], []>} : vector<8x32xbf16>, vector<32x256xbf16>, vector<8x256xf32> -> vector<8x256xf32>
    %c0_43 = arith.constant 0 : index
    %c0_44 = arith.constant 0 : index
    %116 = vector.load %arg14[%c0_43, %c0_44] : memref<1x256xf32, #tpu.memory_space<vmem>>, vector<1x256xf32>
    %117 = vector.broadcast %116 : vector<1x256xf32> to vector<8x256xf32>
    %118 = arith.addf %115, %117 : vector<8x256xf32>
    %cst_45 = arith.constant 0.000000e+00 : f32
    %119 = vector.broadcast %cst_45 : f32 to vector<8x256xf32>
    %120 = arith.cmpf ogt, %118, %119 : vector<8x256xf32>
    %cst_46 = arith.constant 0.000000e+00 : f32
    %121 = vector.broadcast %cst_46 : f32 to vector<8x256xf32>
    %122 = arith.minimumf %118, %121 : vector<8x256xf32>
    %123 = math.exp %122 : vector<8x256xf32>
    %cst_47 = arith.constant 1.000000e+00 : f32
    %124 = vector.broadcast %cst_47 : f32 to vector<8x256xf32>
    %125 = arith.subf %123, %124 : vector<8x256xf32>
    %126 = arith.select %120, %118, %125 : vector<8x256xi1>, vector<8x256xf32>
    %127 = arith.truncf %126 : vector<8x256xf32> to vector<8x256xbf16>
    %c0_48 = arith.constant 0 : index
    %c0_49 = arith.constant 0 : index
    %128 = vector.load %arg15[%c0_48, %c0_49] : memref<256x192xbf16, #tpu.memory_space<vmem>>, vector<256x192xbf16>
    %cst_50 = arith.constant dense<0.000000e+00> : vector<8x192xf32>
    %129 = tpu.matmul %127, %128, %cst_50 {dimension_numbers = #tpu.dot_dimension_numbers<[1], [0], [0], [1], [0, 0, 1, 1], [], []>} : vector<8x256xbf16>, vector<256x192xbf16>, vector<8x192xf32> -> vector<8x192xf32>
    %c0_51 = arith.constant 0 : index
    %c0_52 = arith.constant 0 : index
    %130 = vector.load %arg16[%c0_51, %c0_52] : memref<1x192xf32, #tpu.memory_space<vmem>>, vector<1x192xf32>
    %131 = vector.broadcast %130 : vector<1x192xf32> to vector<8x192xf32>
    %132 = arith.addf %129, %131 : vector<8x192xf32>
    %cst_53 = arith.constant 0.000000e+00 : f32
    %133 = vector.broadcast %cst_53 : f32 to vector<8x192xf32>
    %134 = arith.cmpf ogt, %132, %133 : vector<8x192xf32>
    %cst_54 = arith.constant 0.000000e+00 : f32
    %135 = vector.broadcast %cst_54 : f32 to vector<8x192xf32>
    %136 = arith.minimumf %132, %135 : vector<8x192xf32>
    %137 = math.exp %136 : vector<8x192xf32>
    %cst_55 = arith.constant 1.000000e+00 : f32
    %138 = vector.broadcast %cst_55 : f32 to vector<8x192xf32>
    %139 = arith.subf %137, %138 : vector<8x192xf32>
    %140 = arith.select %134, %132, %139 : vector<8x192xi1>, vector<8x192xf32>
    %141 = arith.truncf %140 : vector<8x192xf32> to vector<8x192xbf16>
    %c0_56 = arith.constant 0 : index
    %c0_57 = arith.constant 0 : index
    %142 = vector.load %arg17[%c0_56, %c0_57] : memref<192x128xbf16, #tpu.memory_space<vmem>>, vector<192x128xbf16>
    %cst_58 = arith.constant dense<0.000000e+00> : vector<8x128xf32>
    %143 = tpu.matmul %141, %142, %cst_58 {dimension_numbers = #tpu.dot_dimension_numbers<[1], [0], [0], [1], [0, 0, 1, 1], [], []>} : vector<8x192xbf16>, vector<192x128xbf16>, vector<8x128xf32> -> vector<8x128xf32>
    %c0_59 = arith.constant 0 : index
    %c0_60 = arith.constant 0 : index
    %144 = vector.load %arg18[%c0_59, %c0_60] : memref<1x128xf32, #tpu.memory_space<vmem>>, vector<1x128xf32>
    %145 = vector.broadcast %144 : vector<1x128xf32> to vector<8x128xf32>
    %146 = arith.addf %143, %145 : vector<8x128xf32>
    %cst_61 = arith.constant 0.000000e+00 : f32
    %147 = vector.broadcast %cst_61 : f32 to vector<8x128xf32>
    %148 = arith.cmpf ogt, %146, %147 : vector<8x128xf32>
    %cst_62 = arith.constant 0.000000e+00 : f32
    %149 = vector.broadcast %cst_62 : f32 to vector<8x128xf32>
    %150 = arith.minimumf %146, %149 : vector<8x128xf32>
    %151 = math.exp %150 : vector<8x128xf32>
    %cst_63 = arith.constant 1.000000e+00 : f32
    %152 = vector.broadcast %cst_63 : f32 to vector<8x128xf32>
    %153 = arith.subf %151, %152 : vector<8x128xf32>
    %154 = arith.select %148, %146, %153 : vector<8x128xi1>, vector<8x128xf32>
    %155 = arith.truncf %154 : vector<8x128xf32> to vector<8x128xbf16>
    %c0_64 = arith.constant 0 : index
    %c0_65 = arith.constant 0 : index
    %156 = vector.load %arg19[%c0_64, %c0_65] : memref<128x256xbf16, #tpu.memory_space<vmem>>, vector<128x256xbf16>
    %cst_66 = arith.constant dense<0.000000e+00> : vector<8x256xf32>
    %157 = tpu.matmul %155, %156, %cst_66 {dimension_numbers = #tpu.dot_dimension_numbers<[1], [0], [0], [1], [0, 0, 1, 1], [], []>} : vector<8x128xbf16>, vector<128x256xbf16>, vector<8x256xf32> -> vector<8x256xf32>
    %c0_67 = arith.constant 0 : index
    %c0_68 = arith.constant 0 : index
    %158 = vector.load %arg20[%c0_67, %c0_68] : memref<1x256xf32, #tpu.memory_space<vmem>>, vector<1x256xf32>
    %159 = vector.broadcast %158 : vector<1x256xf32> to vector<8x256xf32>
    %160 = arith.addf %157, %159 : vector<8x256xf32>
    %cst_69 = arith.constant 0.000000e+00 : f32
    %161 = vector.broadcast %cst_69 : f32 to vector<8x256xf32>
    %162 = arith.cmpf ogt, %160, %161 : vector<8x256xf32>
    %cst_70 = arith.constant 0.000000e+00 : f32
    %163 = vector.broadcast %cst_70 : f32 to vector<8x256xf32>
    %164 = arith.minimumf %160, %163 : vector<8x256xf32>
    %165 = math.exp %164 : vector<8x256xf32>
    %cst_71 = arith.constant 1.000000e+00 : f32
    %166 = vector.broadcast %cst_71 : f32 to vector<8x256xf32>
    %167 = arith.subf %165, %166 : vector<8x256xf32>
    %168 = arith.select %162, %160, %167 : vector<8x256xi1>, vector<8x256xf32>
    %c0_72 = arith.constant 0 : index
    %c0_73 = arith.constant 0 : index
    %169 = vector.load %arg21[%c0_72, %c0_73] : memref<8x256xf32, #tpu.memory_space<vmem>>, vector<8x256xf32>
    tpu.vector_store %arg21[%c0_72, %c0_73], %168 {strides = array<i32>} : memref<8x256xf32, #tpu.memory_space<vmem>>, vector<8x256xf32>,
    %c0_74 = arith.constant 0 : index
    %c0_75 = arith.constant 0 : index
    %170 = vector.load %arg22[%c0_74, %c0_75] : memref<8x64xf32, #tpu.memory_space<vmem>>, vector<8x64xf32>
    tpu.vector_store %arg22[%c0_74, %c0_75], %104 {strides = array<i32>} : memref<8x64xf32, #tpu.memory_space<vmem>>, vector<8x64xf32>,
    return
  }
  func.func @transform_0(%arg0: i32) -> (i32, i32) {
    %c0_i32 = arith.constant 0 : i32
    %c0_i32_0 = arith.constant 0 : i32
    return %arg0, %c0_i32 : i32, i32
  }
  func.func @transform_1(%arg0: i32) -> (i32, i32) {
    %c0_i32 = arith.constant 0 : i32
    %c0_i32_0 = arith.constant 0 : i32
    return %arg0, %c0_i32 : i32, i32
  }
  func.func @transform_2(%arg0: i32) -> (i32, i32) {
    %c0_i32 = arith.constant 0 : i32
    %c0_i32_0 = arith.constant 0 : i32
    %c0_i32_1 = arith.constant 0 : i32
    return %c0_i32, %c0_i32_0 : i32, i32
  }
  func.func @transform_3(%arg0: i32) -> (i32, i32) {
    %c0_i32 = arith.constant 0 : i32
    %c0_i32_0 = arith.constant 0 : i32
    %c0_i32_1 = arith.constant 0 : i32
    return %c0_i32, %c0_i32_0 : i32, i32
  }
  func.func @transform_4(%arg0: i32) -> (i32, i32) {
    %c0_i32 = arith.constant 0 : i32
    %c0_i32_0 = arith.constant 0 : i32
    %c0_i32_1 = arith.constant 0 : i32
    return %c0_i32, %c0_i32_0 : i32, i32
  }
  func.func @transform_5(%arg0: i32) -> (i32, i32) {
    %c0_i32 = arith.constant 0 : i32
    %c0_i32_0 = arith.constant 0 : i32
    %c0_i32_1 = arith.constant 0 : i32
    return %c0_i32, %c0_i32_0 : i32, i32
  }
  func.func @transform_6(%arg0: i32) -> (i32, i32) {
    %c0_i32 = arith.constant 0 : i32
    %c0_i32_0 = arith.constant 0 : i32
    %c0_i32_1 = arith.constant 0 : i32
    return %c0_i32, %c0_i32_0 : i32, i32
  }
  func.func @transform_7(%arg0: i32) -> (i32, i32) {
    %c0_i32 = arith.constant 0 : i32
    %c0_i32_0 = arith.constant 0 : i32
    %c0_i32_1 = arith.constant 0 : i32
    return %c0_i32, %c0_i32_0 : i32, i32
  }
  func.func @transform_8(%arg0: i32) -> (i32, i32) {
    %c0_i32 = arith.constant 0 : i32
    %c0_i32_0 = arith.constant 0 : i32
    %c0_i32_1 = arith.constant 0 : i32
    return %c0_i32, %c0_i32_0 : i32, i32
  }
  func.func @transform_9(%arg0: i32) -> (i32, i32) {
    %c0_i32 = arith.constant 0 : i32
    %c0_i32_0 = arith.constant 0 : i32
    %c0_i32_1 = arith.constant 0 : i32
    return %c0_i32, %c0_i32_0 : i32, i32
  }
  func.func @transform_10(%arg0: i32) -> (i32, i32) {
    %c0_i32 = arith.constant 0 : i32
    %c0_i32_0 = arith.constant 0 : i32
    %c0_i32_1 = arith.constant 0 : i32
    return %c0_i32, %c0_i32_0 : i32, i32
  }
  func.func @transform_11(%arg0: i32) -> (i32, i32) {
    %c0_i32 = arith.constant 0 : i32
    %c0_i32_0 = arith.constant 0 : i32
    %c0_i32_1 = arith.constant 0 : i32
    return %c0_i32, %c0_i32_0 : i32, i32
  }
  func.func @transform_12(%arg0: i32) -> (i32, i32) {
    %c0_i32 = arith.constant 0 : i32
    %c0_i32_0 = arith.constant 0 : i32
    %c0_i32_1 = arith.constant 0 : i32
    return %c0_i32, %c0_i32_0 : i32, i32
  }
  func.func @transform_13(%arg0: i32) -> (i32, i32) {
    %c0_i32 = arith.constant 0 : i32
    %c0_i32_0 = arith.constant 0 : i32
    %c0_i32_1 = arith.constant 0 : i32
    return %c0_i32, %c0_i32_0 : i32, i32
  }
  func.func @transform_14(%arg0: i32) -> (i32, i32) {
    %c0_i32 = arith.constant 0 : i32
    %c0_i32_0 = arith.constant 0 : i32
    %c0_i32_1 = arith.constant 0 : i32
    return %c0_i32, %c0_i32_0 : i32, i32
  }
  func.func @transform_15(%arg0: i32) -> (i32, i32) {
    %c0_i32 = arith.constant 0 : i32
    %c0_i32_0 = arith.constant 0 : i32
    %c0_i32_1 = arith.constant 0 : i32
    return %c0_i32, %c0_i32_0 : i32, i32
  }
  func.func @transform_16(%arg0: i32) -> (i32, i32) {
    %c0_i32 = arith.constant 0 : i32
    %c0_i32_0 = arith.constant 0 : i32
    %c0_i32_1 = arith.constant 0 : i32
    return %c0_i32, %c0_i32_0 : i32, i32
  }
  func.func @transform_17(%arg0: i32) -> (i32, i32) {
    %c0_i32 = arith.constant 0 : i32
    %c0_i32_0 = arith.constant 0 : i32
    %c0_i32_1 = arith.constant 0 : i32
    return %c0_i32, %c0_i32_0 : i32, i32
  }
  func.func @transform_18(%arg0: i32) -> (i32, i32) {
    %c0_i32 = arith.constant 0 : i32
    %c0_i32_0 = arith.constant 0 : i32
    %c0_i32_1 = arith.constant 0 : i32
    return %c0_i32, %c0_i32_0 : i32, i32
  }
  func.func @transform_19(%arg0: i32) -> (i32, i32) {
    %c0_i32 = arith.constant 0 : i32
    %c0_i32_0 = arith.constant 0 : i32
    %c0_i32_1 = arith.constant 0 : i32
    return %c0_i32, %c0_i32_0 : i32, i32
  }
  func.func @transform_20(%arg0: i32) -> (i32, i32) {
    %c0_i32 = arith.constant 0 : i32
    %c0_i32_0 = arith.constant 0 : i32
    return %arg0, %c0_i32 : i32, i32
  }
  func.func @transform_21(%arg0: i32) -> (i32, i32) {
    %c0_i32 = arith.constant 0 : i32
    %c0_i32_0 = arith.constant 0 : i32
    return %arg0, %c0_i32 : i32, i32
  }
}

</mosaic_0001>

<llo_original>
// kernel: linear_vae_forward.1
$region0: #{linear_vae_forward.1}
  #allocation0 [shape = 'u32[]', space=smem, size = 0x4, offset = 0x4, fixed_abs, tag = 'smem constant byte address 0x4 - core index']
  #allocation1 [shape = 'u32[144,128]{1,0:T(1,128)}', space=vmem, size = 0x12000, scoped, tag = 'internal scratch']
  %s0 = inlined_call_operand.vmem [shape: s32[8,8], index: 0, kind: input, shape index: {}]
  %s1 = inlined_call_operand.vmem [shape: f32[8,32], index: 1, kind: input, shape index: {}]
  %s2 = inlined_call_operand.hbm [shape: bf16[1024,256], index: 2, kind: input, shape index: {}]
  %s3 = inlined_call_operand.vmem [shape: f32[1,256], index: 3, kind: input, shape index: {}]
  %s4 = inlined_call_operand.vmem [shape: bf16[256,192], index: 4, kind: input, shape index: {}]
  %s5 = inlined_call_operand.vmem [shape: f32[1,192], index: 5, kind: input, shape index: {}]
  %s6 = inlined_call_operand.vmem [shape: bf16[192,128], index: 6, kind: input, shape index: {}]
  %s7 = inlined_call_operand.vmem [shape: f32[1,128], index: 7, kind: input, shape index: {}]
  %s8 = inlined_call_operand.vmem [shape: bf16[128,64], index: 8, kind: input, shape index: {}]
  %s9 = inlined_call_operand.vmem [shape: f32[1,64], index: 9, kind: input, shape index: {}]
  %s10 = inlined_call_operand.vmem [shape: bf16[64,64], index: 10, kind: input, shape index: {}]
  %s11 = inlined_call_operand.vmem [shape: f32[1,64], index: 11, kind: input, shape index: {}]
  %s12 = inlined_call_operand.vmem [shape: bf16[32,256], index: 12, kind: input, shape index: {}]
  %s13 = inlined_call_operand.vmem [shape: f32[1,256], index: 13, kind: input, shape index: {}]
  %s14 = inlined_call_operand.vmem [shape: bf16[256,192], index: 14, kind: input, shape index: {}]
  %s15 = inlined_call_operand.vmem [shape: f32[1,192], index: 15, kind: input, shape index: {}]
  %s16 = inlined_call_operand.vmem [shape: bf16[192,128], index: 16, kind: input, shape index: {}]
  %s17 = inlined_call_operand.vmem [shape: f32[1,128], index: 17, kind: input, shape index: {}]
  %s18 = inlined_call_operand.vmem [shape: bf16[128,256], index: 18, kind: input, shape index: {}]
  %s19 = inlined_call_operand.vmem [shape: f32[1,256], index: 19, kind: input, shape index: {}]
  %s20 = inlined_call_operand.vmem [shape: f32[8,256], index: 20, kind: output, shape index: {0}]
  %s21 = inlined_call_operand.vmem [shape: f32[8,64], index: 21, kind: output, shape index: {1}]
  %22 = xla_tuple %s20, %s21
  %s23 = sld [smem:[#allocation0]]
  $region102: #{linear_vae_forward.1} parent=0
    _
  %s25 = ssub.s32 1, %s23
  %s26 = scalar_select 0, %s25, %s23
  $region1: #{linear_vae_forward.1} parent=0
    #allocation2 [shape = 'u8[524288]{0}', space=vmem, size = 0x80000, scoped, tag = 'input window, operand 2, single buffered']
    #allocation3 [shape = 's32[1]{0}', space=sflag, size = 0x4, scoped, tag = 'scoped memory for linear_vae_forward.1']
    %27 = vsyncpa [#allocation3], 0
    // Predicated region
    $region2: #{linear_vae_forward.1} parent=1 // pred_check
      _
    $region3: #{linear_vae_forward.1} parent=1 // pred_check_branch
      %29 = sbr.rel (0) target = $region5
    $region4: #{linear_vae_forward.1} parent=1 // pred_region
      _
    $region5: #{linear_vae_forward.1} parent=1 // pred_fallthru
      _
    // Predicated region
    $region6: #{linear_vae_forward.1} parent=1 // pred_check
      _
    $region7: #{linear_vae_forward.1} parent=1 // pred_check_branch
      %31 = sbr.rel (0) target = $region9
    $region8: #{linear_vae_forward.1} parent=1 // pred_region
      _
    $region9: #{linear_vae_forward.1} parent=1 // pred_fallthru
      _
    // Predicated region
    $region10: #{linear_vae_forward.1} parent=1 // pred_check
      _
    $region11: #{linear_vae_forward.1} parent=1 // pred_check_branch
      %33 = sbr.rel (0) target = $region13
    $region12: #{linear_vae_forward.1} parent=1 // pred_region
      %s35 = ssub.s32 16384, 16384
      %36 = vsyncadd [#allocation3], %s35
      %s37 = sshll.u32 [#allocation2], 4
      %s38 = int_to_ptr.vmem [resolvable:$true] %s37
      %43 = dma.hbm_to_vmem [thread:$0]  %s2, 16384, %s38, [#allocation3], 128, 128, 8
    $region13: #{linear_vae_forward.1} parent=1 // pred_fallthru
      _
    // Predicated region
    $region14: #{linear_vae_forward.1} parent=1 // pred_check
      _
    $region15: #{linear_vae_forward.1} parent=1 // pred_check_branch
      %45 = sbr.rel (0) target = $region17
    $region16: #{linear_vae_forward.1} parent=1 // pred_region
      _
    $region17: #{linear_vae_forward.1} parent=1 // pred_fallthru
      _
    // Predicated region
    $region18: #{linear_vae_forward.1} parent=1 // pred_check
      _
    $region19: #{linear_vae_forward.1} parent=1 // pred_check_branch
      %47 = sbr.rel (0) target = $region21
    $region20: #{linear_vae_forward.1} parent=1 // pred_region
      _
    $region21: #{linear_vae_forward.1} parent=1 // pred_fallthru
      _
    // Predicated region
    $region22: #{linear_vae_forward.1} parent=1 // pred_check
      _
    $region23: #{linear_vae_forward.1} parent=1 // pred_check_branch
      %49 = sbr.rel (0) target = $region25
    $region24: #{linear_vae_forward.1} parent=1 // pred_region
      _
    $region25: #{linear_vae_forward.1} parent=1 // pred_fallthru
      _
    // Predicated region
    $region26: #{linear_vae_forward.1} parent=1 // pred_check
      _
    $region27: #{linear_vae_forward.1} parent=1 // pred_check_branch
      %51 = sbr.rel (0) target = $region29
    $region28: #{linear_vae_forward.1} parent=1 // pred_region
      _
    $region29: #{linear_vae_forward.1} parent=1 // pred_fallthru
      _
    // Predicated region
    $region30: #{linear_vae_forward.1} parent=1 // pred_check
      _
    $region31: #{linear_vae_forward.1} parent=1 // pred_check_branch
      %53 = sbr.rel (0) target = $region33
    $region32: #{linear_vae_forward.1} parent=1 // pred_region
      _
    $region33: #{linear_vae_forward.1} parent=1 // pred_fallthru
      _
    // Predicated region
    $region34: #{linear_vae_forward.1} parent=1 // pred_check
      _
    $region35: #{linear_vae_forward.1} parent=1 // pred_check_branch
      %55 = sbr.rel (0) target = $region37
    $region36: #{linear_vae_forward.1} parent=1 // pred_region
      _
    $region37: #{linear_vae_forward.1} parent=1 // pred_fallthru
      _
    // Predicated region
    $region38: #{linear_vae_forward.1} parent=1 // pred_check
      _
    $region39: #{linear_vae_forward.1} parent=1 // pred_check_branch
      %57 = sbr.rel (0) target = $region41
    $region40: #{linear_vae_forward.1} parent=1 // pred_region
      _
    $region41: #{linear_vae_forward.1} parent=1 // pred_fallthru
      _
    // Predicated region
    $region42: #{linear_vae_forward.1} parent=1 // pred_check
      _
    $region43: #{linear_vae_forward.1} parent=1 // pred_check_branch
      %59 = sbr.rel (0) target = $region45
    $region44: #{linear_vae_forward.1} parent=1 // pred_region
      _
    $region45: #{linear_vae_forward.1} parent=1 // pred_fallthru
      _
    // Predicated region
    $region46: #{linear_vae_forward.1} parent=1 // pred_check
      _
    $region47: #{linear_vae_forward.1} parent=1 // pred_check_branch
      %61 = sbr.rel (0) target = $region49
    $region48: #{linear_vae_forward.1} parent=1 // pred_region
      _
    $region49: #{linear_vae_forward.1} parent=1 // pred_fallthru
      _
    // Predicated region
    $region50: #{linear_vae_forward.1} parent=1 // pred_check
      _
    $region51: #{linear_vae_forward.1} parent=1 // pred_check_branch
      %63 = sbr.rel (0) target = $region53
    $region52: #{linear_vae_forward.1} parent=1 // pred_region
      _
    $region53: #{linear_vae_forward.1} parent=1 // pred_fallthru
      _
    // Predicated region
    $region54: #{linear_vae_forward.1} parent=1 // pred_check
      _
    $region55: #{linear_vae_forward.1} parent=1 // pred_check_branch
      %65 = sbr.rel (0) target = $region57
    $region56: #{linear_vae_forward.1} parent=1 // pred_region
      _
    $region57: #{linear_vae_forward.1} parent=1 // pred_fallthru
      _
    // Predicated region
    $region58: #{linear_vae_forward.1} parent=1 // pred_check
      _
    $region59: #{linear_vae_forward.1} parent=1 // pred_check_branch
      %67 = sbr.rel (0) target = $region61
    $region60: #{linear_vae_forward.1} parent=1 // pred_region
      _
    $region61: #{linear_vae_forward.1} parent=1 // pred_fallthru
      _
    // Predicated region
    $region62: #{linear_vae_forward.1} parent=1 // pred_check
      _
    $region63: #{linear_vae_forward.1} parent=1 // pred_check_branch
      %69 = sbr.rel (0) target = $region65
    $region64: #{linear_vae_forward.1} parent=1 // pred_region
      _
    $region65: #{linear_vae_forward.1} parent=1 // pred_fallthru
      _
    // Predicated region
    $region66: #{linear_vae_forward.1} parent=1 // pred_check
      _
    $region67: #{linear_vae_forward.1} parent=1 // pred_check_branch
      %71 = sbr.rel (0) target = $region69
    $region68: #{linear_vae_forward.1} parent=1 // pred_region
      _
    $region69: #{linear_vae_forward.1} parent=1 // pred_fallthru
      _
    // Predicated region
    $region70: #{linear_vae_forward.1} parent=1 // pred_check
      _
    $region71: #{linear_vae_forward.1} parent=1 // pred_check_branch
      %73 = sbr.rel (0) target = $region73
    $region72: #{linear_vae_forward.1} parent=1 // pred_region
      _
    $region73: #{linear_vae_forward.1} parent=1 // pred_fallthru
      _
    // Predicated region
    $region74: #{linear_vae_forward.1} parent=1 // pred_check
      _
    $region75: #{linear_vae_forward.1} parent=1 // pred_check_branch
      %75 = sbr.rel (0) target = $region77
    $region76: #{linear_vae_forward.1} parent=1 // pred_region
      _
    $region77: #{linear_vae_forward.1} parent=1 // pred_fallthru
      _
    // Predicated region
    $region78: #{linear_vae_forward.1} parent=1 // pred_check
      _
    $region79: #{linear_vae_forward.1} parent=1 // pred_check_branch
      %77 = sbr.rel (0) target = $region81
    $region80: #{linear_vae_forward.1} parent=1 // pred_region
      _
    $region81: #{linear_vae_forward.1} parent=1 // pred_fallthru
      _
    // Predicated region
    $region82: #{linear_vae_forward.1} parent=1 // pred_check
      _
    $region83: #{linear_vae_forward.1} parent=1 // pred_check_branch
      %79 = sbr.rel (0) target = $region85
    $region84: #{linear_vae_forward.1} parent=1 // pred_region
      %80 = dma.done [#allocation3], 16384
    $region85: #{linear_vae_forward.1} parent=1 // pred_fallthru
      _
    %v82 = vld [vmem:[%s0] sm:$0xff]
    %v83 = vlaneseq
    %v84 = vand.u32 %v83, 127
    %85 = vset.pattern.permute.xlu0 0
    %86 = vperm.xlu0 %85, %v82
    %v87 = vpop.permute.xlu0 %86
    %vm88 = vcmp.eq.s32.totalorder %v87, %v84
    %v89 = vsel %vm88, 1, 0
    %v90 = vcvt.s32.f32 %v89
    %91 = vset.pattern.permute.xlu0 1
    %92 = vperm.xlu0 %91, %v82
    %v93 = vpop.permute.xlu0 %92
    %vm94 = vcmp.eq.s32.totalorder %v93, %v84
    %v95 = vsel %vm94, 1, 0
    %v96 = vcvt.s32.f32 %v95
    %97 = vset.pattern.permute.xlu0 2
    %98 = vperm.xlu0 %97, %v82
    %v99 = vpop.permute.xlu0 %98
    %vm100 = vcmp.eq.s32.totalorder %v99, %v84
    %v101 = vsel %vm100, 1, 0
    %v102 = vcvt.s32.f32 %v101
    %103 = vset.pattern.permute.xlu0 3
    %104 = vperm.xlu0 %103, %v82
    %v105 = vpop.permute.xlu0 %104
    %vm106 = vcmp.eq.s32.totalorder %v105, %v84
    %v107 = vsel %vm106, 1, 0
    %v108 = vcvt.s32.f32 %v107
    %109 = vset.pattern.permute.xlu0 4
    %110 = vperm.xlu0 %109, %v82
    %v111 = vpop.permute.xlu0 %110
    %vm112 = vcmp.eq.s32.totalorder %v111, %v84
    %v113 = vsel %vm112, 1, 0
    %v114 = vcvt.s32.f32 %v113
    %115 = vset.pattern.permute.xlu0 5
    %116 = vperm.xlu0 %115, %v82
    %v117 = vpop.permute.xlu0 %116
    %vm118 = vcmp.eq.s32.totalorder %v117, %v84
    %v119 = vsel %vm118, 1, 0
    %v120 = vcvt.s32.f32 %v119
    %121 = vset.pattern.permute.xlu0 6
    %122 = vperm.xlu0 %121, %v82
    %v123 = vpop.permute.xlu0 %122
    %vm124 = vcmp.eq.s32.totalorder %v123, %v84
    %v125 = vsel %vm124, 1, 0
    %v126 = vcvt.s32.f32 %v125
    %127 = vset.pattern.permute.xlu0 7
    %128 = vperm.xlu0 %127, %v82
    %v129 = vpop.permute.xlu0 %128
    %vm130 = vcmp.eq.s32.totalorder %v129, %v84
    %v131 = vsel %vm130, 1, 0
    %v132 = vcvt.s32.f32 %v131
    %v133 = vpack.c.bf16 %v90, %v90
    %v134 = vpack.c.bf16 %v96, %v96
    %v135 = vpack.c.bf16 %v102, %v102
    %v136 = vpack.c.bf16 %v108, %v108
    %v137 = vpack.c.bf16 %v114, %v114
    %v138 = vpack.c.bf16 %v120, %v120
    %v139 = vpack.c.bf16 %v126, %v126
    %v140 = vpack.c.bf16 %v132, %v132
    %v141 = vld [vmem:[#allocation2] sm:$0xff]
    %v142 = vld [vmem:[#allocation2 + $0x8] sm:$0xff]
    %v143 = vld [vmem:[#allocation2 + $0x10] sm:$0xff]
    %v144 = vld [vmem:[#allocation2 + $0x18] sm:$0xff]
    %v145 = vld [vmem:[#allocation2 + $0x20] sm:$0xff]
    %v146 = vld [vmem:[#allocation2 + $0x28] sm:$0xff]
    %v147 = vld [vmem:[#allocation2 + $0x30] sm:$0xff]
    %v148 = vld [vmem:[#allocation2 + $0x38] sm:$0xff]
    %v149 = vld [vmem:[#allocation2 + $0x40] sm:$0xff]
    %v150 = vld [vmem:[#allocation2 + $0x48] sm:$0xff]
    %v151 = vld [vmem:[#allocation2 + $0x50] sm:$0xff]
    %v152 = vld [vmem:[#allocation2 + $0x58] sm:$0xff]
    %v153 = vld [vmem:[#allocation2 + $0x60] sm:$0xff]
    %v154 = vld [vmem:[#allocation2 + $0x68] sm:$0xff]
    %v155 = vld [vmem:[#allocation2 + $0x70] sm:$0xff]
    %v156 = vld [vmem:[#allocation2 + $0x78] sm:$0xff]
    %v157 = vld [vmem:[#allocation2 + $0x80] sm:$0xff]
    %v158 = vld [vmem:[#allocation2 + $0x88] sm:$0xff]
    %v159 = vld [vmem:[#allocation2 + $0x90] sm:$0xff]
    %v160 = vld [vmem:[#allocation2 + $0x98] sm:$0xff]
    %v161 = vld [vmem:[#allocation2 + $0xa0] sm:$0xff]
    %v162 = vld [vmem:[#allocation2 + $0xa8] sm:$0xff]
    %v163 = vld [vmem:[#allocation2 + $0xb0] sm:$0xff]
    %v164 = vld [vmem:[#allocation2 + $0xb8] sm:$0xff]
    %v165 = vld [vmem:[#allocation2 + $0xc0] sm:$0xff]
    %v166 = vld [vmem:[#allocation2 + $0xc8] sm:$0xff]
    %v167 = vld [vmem:[#allocation2 + $0xd0] sm:$0xff]
    %v168 = vld [vmem:[#allocation2 + $0xd8] sm:$0xff]
    %v169 = vld [vmem:[#allocation2 + $0xe0] sm:$0xff]
    %v170 = vld [vmem:[#allocation2 + $0xe8] sm:$0xff]
    %v171 = vld [vmem:[#allocation2 + $0xf0] sm:$0xff]
    %v172 = vld [vmem:[#allocation2 + $0xf8] sm:$0xff]
    %v173 = vld [vmem:[#allocation2 + $0x100] sm:$0xff]
    %v174 = vld [vmem:[#allocation2 + $0x108] sm:$0xff]
    %v175 = vld [vmem:[#allocation2 + $0x110] sm:$0xff]
    %v176 = vld [vmem:[#allocation2 + $0x118] sm:$0xff]
    %v177 = vld [vmem:[#allocation2 + $0x120] sm:$0xff]
    %v178 = vld [vmem:[#allocation2 + $0x128] sm:$0xff]
    %v179 = vld [vmem:[#allocation2 + $0x130] sm:$0xff]
    %v180 = vld [vmem:[#allocation2 + $0x138] sm:$0xff]
    %v181 = vld [vmem:[#allocation2 + $0x140] sm:$0xff]
    %v182 = vld [vmem:[#allocation2 + $0x148] sm:$0xff]
    %v183 = vld [vmem:[#allocation2 + $0x150] sm:$0xff]
    %v184 = vld [vmem:[#allocation2 + $0x158] sm:$0xff]
    %v185 = vld [vmem:[#allocation2 + $0x160] sm:$0xff]
    %v186 = vld [vmem:[#allocation2 + $0x168] sm:$0xff]
    %v187 = vld [vmem:[#allocation2 + $0x170] sm:$0xff]
    %v188 = vld [vmem:[#allocation2 + $0x178] sm:$0xff]
    %v189 = vld [vmem:[#allocation2 + $0x180] sm:$0xff]
    %v190 = vld [vmem:[#allocation2 + $0x188] sm:$0xff]
    %v191 = vld [vmem:[#allocation2 + $0x190] sm:$0xff]
    %v192 = vld [vmem:[#allocation2 + $0x198] sm:$0xff]
    %v193 = vld [vmem:[#allocation2 + $0x1a0] sm:$0xff]
    %v194 = vld [vmem:[#allocation2 + $0x1a8] sm:$0xff]
    %v195 = vld [vmem:[#allocation2 + $0x1b0] sm:$0xff]
    %v196 = vld [vmem:[#allocation2 + $0x1b8] sm:$0xff]
    %v197 = vld [vmem:[#allocation2 + $0x1c0] sm:$0xff]
    %v198 = vld [vmem:[#allocation2 + $0x1c8] sm:$0xff]
    %v199 = vld [vmem:[#allocation2 + $0x1d0] sm:$0xff]
    %v200 = vld [vmem:[#allocation2 + $0x1d8] sm:$0xff]
    %v201 = vld [vmem:[#allocation2 + $0x1e0] sm:$0xff]
    %v202 = vld [vmem:[#allocation2 + $0x1e8] sm:$0xff]
    %v203 = vld [vmem:[#allocation2 + $0x1f0] sm:$0xff]
    %v204 = vld [vmem:[#allocation2 + $0x1f8] sm:$0xff]
    %v205 = vld [vmem:[#allocation2 + $0x200] sm:$0xff]
    %v206 = vld [vmem:[#allocation2 + $0x208] sm:$0xff]
    %v207 = vld [vmem:[#allocation2 + $0x210] sm:$0xff]
    %v208 = vld [vmem:[#allocation2 + $0x218] sm:$0xff]
    %v209 = vld [vmem:[#allocation2 + $0x220] sm:$0xff]
    %v210 = vld [vmem:[#allocation2 + $0x228] sm:$0xff]
    %v211 = vld [vmem:[#allocation2 + $0x230] sm:$0xff]
    %v212 = vld [vmem:[#allocation2 + $0x238] sm:$0xff]
    %v213 = vld [vmem:[#allocation2 + $0x240] sm:$0xff]
    %v214 = vld [vmem:[#allocation2 + $0x248] sm:$0xff]
    %v215 = vld [vmem:[#allocation2 + $0x250] sm:$0xff]
    %v216 = vld [vmem:[#allocation2 + $0x258] sm:$0xff]
    %v217 = vld [vmem:[#allocation2 + $0x260] sm:$0xff]
    %v218 = vld [vmem:[#allocation2 + $0x268] sm:$0xff]
    %v219 = vld [vmem:[#allocation2 + $0x270] sm:$0xff]
    %v220 = vld [vmem:[#allocation2 + $0x278] sm:$0xff]
    %v221 = vld [vmem:[#allocation2 + $0x280] sm:$0xff]
    %v222 = vld [vmem:[#allocation2 + $0x288] sm:$0xff]
    %v223 = vld [vmem:[#allocation2 + $0x290] sm:$0xff]
    %v224 = vld [vmem:[#allocation2 + $0x298] sm:$0xff]
    %v225 = vld [vmem:[#allocation2 + $0x2a0] sm:$0xff]
    %v226 = vld [vmem:[#allocation2 + $0x2a8] sm:$0xff]
    %v227 = vld [vmem:[#allocation2 + $0x2b0] sm:$0xff]
    %v228 = vld [vmem:[#allocation2 + $0x2b8] sm:$0xff]
    %v229 = vld [vmem:[#allocation2 + $0x2c0] sm:$0xff]
    %v230 = vld [vmem:[#allocation2 + $0x2c8] sm:$0xff]
    %v231 = vld [vmem:[#allocation2 + $0x2d0] sm:$0xff]
    %v232 = vld [vmem:[#allocation2 + $0x2d8] sm:$0xff]
    %v233 = vld [vmem:[#allocation2 + $0x2e0] sm:$0xff]
    %v234 = vld [vmem:[#allocation2 + $0x2e8] sm:$0xff]
    %v235 = vld [vmem:[#allocation2 + $0x2f0] sm:$0xff]
    %v236 = vld [vmem:[#allocation2 + $0x2f8] sm:$0xff]
    %v237 = vld [vmem:[#allocation2 + $0x300] sm:$0xff]
    %v238 = vld [vmem:[#allocation2 + $0x308] sm:$0xff]
    %v239 = vld [vmem:[#allocation2 + $0x310] sm:$0xff]
    %v240 = vld [vmem:[#allocation2 + $0x318] sm:$0xff]
    %v241 = vld [vmem:[#allocation2 + $0x320] sm:$0xff]
    %v242 = vld [vmem:[#allocation2 + $0x328] sm:$0xff]
    %v243 = vld [vmem:[#allocation2 + $0x330] sm:$0xff]
    %v244 = vld [vmem:[#allocation2 + $0x338] sm:$0xff]
    %v245 = vld [vmem:[#allocation2 + $0x340] sm:$0xff]
    %v246 = vld [vmem:[#allocation2 + $0x348] sm:$0xff]
    %v247 = vld [vmem:[#allocation2 + $0x350] sm:$0xff]
    %v248 = vld [vmem:[#allocation2 + $0x358] sm:$0xff]
    %v249 = vld [vmem:[#allocation2 + $0x360] sm:$0xff]
    %v250 = vld [vmem:[#allocation2 + $0x368] sm:$0xff]
    %v251 = vld [vmem:[#allocation2 + $0x370] sm:$0xff]
    %v252 = vld [vmem:[#allocation2 + $0x378] sm:$0xff]
    %v253 = vld [vmem:[#allocation2 + $0x380] sm:$0xff]
    %v254 = vld [vmem:[#allocation2 + $0x388] sm:$0xff]
    %v255 = vld [vmem:[#allocation2 + $0x390] sm:$0xff]
    %v256 = vld [vmem:[#allocation2 + $0x398] sm:$0xff]
    %v257 = vld [vmem:[#allocation2 + $0x3a0] sm:$0xff]
    %v258 = vld [vmem:[#allocation2 + $0x3a8] sm:$0xff]
    %v259 = vld [vmem:[#allocation2 + $0x3b0] sm:$0xff]
    %v260 = vld [vmem:[#allocation2 + $0x3b8] sm:$0xff]
    %v261 = vld [vmem:[#allocation2 + $0x3c0] sm:$0xff]
    %v262 = vld [vmem:[#allocation2 + $0x3c8] sm:$0xff]
    %v263 = vld [vmem:[#allocation2 + $0x3d0] sm:$0xff]
    %v264 = vld [vmem:[#allocation2 + $0x3d8] sm:$0xff]
    %v265 = vld [vmem:[#allocation2 + $0x3e0] sm:$0xff]
    %v266 = vld [vmem:[#allocation2 + $0x3e8] sm:$0xff]
    %v267 = vld [vmem:[#allocation2 + $0x3f0] sm:$0xff]
    %v268 = vld [vmem:[#allocation2 + $0x3f8] sm:$0xff]
    %v269 = vld [vmem:[%s3] sm:$0x3]
    %v271 = vlaneseq
    %v272 = vshrl.u32 %v271, 7
    %v273 = vsub.s32 0, %v272
    %v274 = vrot.slane %v269, %v273
    %v275 = vlaneseq
    %v276 = vshrl.u32 %v275, 7
    %v277 = vsub.s32 1, %v276
    %v278 = vrot.slane %v269, %v277
    %v409 = vunpack.c.l.b16 %v141
    %v410 = vunpack.c.h.b16 %v141
    %v411 = vunpack.c.l.b16 %v142
    %v412 = vunpack.c.h.b16 %v142
    %v413 = vunpack.c.l.b16 %v143
    %v414 = vunpack.c.h.b16 %v143
    %v415 = vunpack.c.l.b16 %v144
    %v416 = vunpack.c.h.b16 %v144
    %v417 = vunpack.c.l.b16 %v145
    %v418 = vunpack.c.h.b16 %v145
    %v419 = vunpack.c.l.b16 %v146
    %v420 = vunpack.c.h.b16 %v146
    %v421 = vunpack.c.l.b16 %v147
    %v422 = vunpack.c.h.b16 %v147
    %v423 = vunpack.c.l.b16 %v148
    %v424 = vunpack.c.h.b16 %v148
    %v425 = vunpack.c.l.b16 %v149
    %v426 = vunpack.c.h.b16 %v149
    %v427 = vunpack.c.l.b16 %v150
    %v428 = vunpack.c.h.b16 %v150
    %v429 = vunpack.c.l.b16 %v151
    %v430 = vunpack.c.h.b16 %v151
    %v431 = vunpack.c.l.b16 %v152
    %v432 = vunpack.c.h.b16 %v152
    %v433 = vunpack.c.l.b16 %v153
    %v434 = vunpack.c.h.b16 %v153
    %v435 = vunpack.c.l.b16 %v154
    %v436 = vunpack.c.h.b16 %v154
    %v437 = vunpack.c.l.b16 %v155
    %v438 = vunpack.c.h.b16 %v155
    %v439 = vunpack.c.l.b16 %v156
    %v440 = vunpack.c.h.b16 %v156
    %v441 = vunpack.c.l.b16 %v157
    %v442 = vunpack.c.h.b16 %v157
    %v443 = vunpack.c.l.b16 %v158
    %v444 = vunpack.c.h.b16 %v158
    %v445 = vunpack.c.l.b16 %v159
    %v446 = vunpack.c.h.b16 %v159
    %v447 = vunpack.c.l.b16 %v160
    %v448 = vunpack.c.h.b16 %v160
    %v449 = vunpack.c.l.b16 %v161
    %v450 = vunpack.c.h.b16 %v161
    %v451 = vunpack.c.l.b16 %v162
    %v452 = vunpack.c.h.b16 %v162
    %v453 = vunpack.c.l.b16 %v163
    %v454 = vunpack.c.h.b16 %v163
    %v455 = vunpack.c.l.b16 %v164
    %v456 = vunpack.c.h.b16 %v164
    %v457 = vunpack.c.l.b16 %v165
    %v458 = vunpack.c.h.b16 %v165
    %v459 = vunpack.c.l.b16 %v166
    %v460 = vunpack.c.h.b16 %v166
    %v461 = vunpack.c.l.b16 %v167
    %v462 = vunpack.c.h.b16 %v167
    %v463 = vunpack.c.l.b16 %v168
    %v464 = vunpack.c.h.b16 %v168
    %v465 = vunpack.c.l.b16 %v169
    %v466 = vunpack.c.h.b16 %v169
    %v467 = vunpack.c.l.b16 %v170
    %v468 = vunpack.c.h.b16 %v170
    %v469 = vunpack.c.l.b16 %v171
    %v470 = vunpack.c.h.b16 %v171
    %v471 = vunpack.c.l.b16 %v172
    %v472 = vunpack.c.h.b16 %v172
    %v473 = vunpack.c.l.b16 %v173
    %v474 = vunpack.c.h.b16 %v173
    %v475 = vunpack.c.l.b16 %v174
    %v476 = vunpack.c.h.b16 %v174
    %v477 = vunpack.c.l.b16 %v175
    %v478 = vunpack.c.h.b16 %v175
    %v479 = vunpack.c.l.b16 %v176
    %v480 = vunpack.c.h.b16 %v176
    %v481 = vunpack.c.l.b16 %v177
    %v482 = vunpack.c.h.b16 %v177
    %v483 = vunpack.c.l.b16 %v178
    %v484 = vunpack.c.h.b16 %v178
    %v485 = vunpack.c.l.b16 %v179
    %v486 = vunpack.c.h.b16 %v179
    %v487 = vunpack.c.l.b16 %v180
    %v488 = vunpack.c.h.b16 %v180
    %v489 = vunpack.c.l.b16 %v181
    %v490 = vunpack.c.h.b16 %v181
    %v491 = vunpack.c.l.b16 %v182
    %v492 = vunpack.c.h.b16 %v182
    %v493 = vunpack.c.l.b16 %v183
    %v494 = vunpack.c.h.b16 %v183
    %v495 = vunpack.c.l.b16 %v184
    %v496 = vunpack.c.h.b16 %v184
    %v497 = vunpack.c.l.b16 %v185
    %v498 = vunpack.c.h.b16 %v185
    %v499 = vunpack.c.l.b16 %v186
    %v500 = vunpack.c.h.b16 %v186
    %v501 = vunpack.c.l.b16 %v187
    %v502 = vunpack.c.h.b16 %v187
    %v503 = vunpack.c.l.b16 %v188
    %v504 = vunpack.c.h.b16 %v188
    %v505 = vunpack.c.l.b16 %v189
    %v506 = vunpack.c.h.b16 %v189
    %v507 = vunpack.c.l.b16 %v190
    %v508 = vunpack.c.h.b16 %v190
    %v509 = vunpack.c.l.b16 %v191
    %v510 = vunpack.c.h.b16 %v191
    %v511 = vunpack.c.l.b16 %v192
    %v512 = vunpack.c.h.b16 %v192
    %v513 = vunpack.c.l.b16 %v193
    %v514 = vunpack.c.h.b16 %v193
    %v515 = vunpack.c.l.b16 %v194
    %v516 = vunpack.c.h.b16 %v194
    %v517 = vunpack.c.l.b16 %v195
    %v518 = vunpack.c.h.b16 %v195
    %v519 = vunpack.c.l.b16 %v196
    %v520 = vunpack.c.h.b16 %v196
    %v521 = vunpack.c.l.b16 %v197
    %v522 = vunpack.c.h.b16 %v197
    %v523 = vunpack.c.l.b16 %v198
    %v524 = vunpack.c.h.b16 %v198
    %v525 = vunpack.c.l.b16 %v199
    %v526 = vunpack.c.h.b16 %v199
    %v527 = vunpack.c.l.b16 %v200
    %v528 = vunpack.c.h.b16 %v200
    %v529 = vunpack.c.l.b16 %v201
    %v530 = vunpack.c.h.b16 %v201
    %v531 = vunpack.c.l.b16 %v202
    %v532 = vunpack.c.h.b16 %v202
    %v533 = vunpack.c.l.b16 %v203
    %v534 = vunpack.c.h.b16 %v203
    %v535 = vunpack.c.l.b16 %v204
    %v536 = vunpack.c.h.b16 %v204
    %v537 = vunpack.c.l.b16 %v205
    %v538 = vunpack.c.h.b16 %v205
    %v539 = vunpack.c.l.b16 %v206
    %v540 = vunpack.c.h.b16 %v206
    %v541 = vunpack.c.l.b16 %v207
    %v542 = vunpack.c.h.b16 %v207
    %v543 = vunpack.c.l.b16 %v208
    %v544 = vunpack.c.h.b16 %v208
    %v545 = vunpack.c.l.b16 %v209
    %v546 = vunpack.c.h.b16 %v209
    %v547 = vunpack.c.l.b16 %v210
    %v548 = vunpack.c.h.b16 %v210
    %v549 = vunpack.c.l.b16 %v211
    %v550 = vunpack.c.h.b16 %v211
    %v551 = vunpack.c.l.b16 %v212
    %v552 = vunpack.c.h.b16 %v212
    %v553 = vunpack.c.l.b16 %v213
    %v554 = vunpack.c.h.b16 %v213
    %v555 = vunpack.c.l.b16 %v214
    %v556 = vunpack.c.h.b16 %v214
    %v557 = vunpack.c.l.b16 %v215
    %v558 = vunpack.c.h.b16 %v215
    %v559 = vunpack.c.l.b16 %v216
    %v560 = vunpack.c.h.b16 %v216
    %v561 = vunpack.c.l.b16 %v217
    %v562 = vunpack.c.h.b16 %v217
    %v563 = vunpack.c.l.b16 %v218
    %v564 = vunpack.c.h.b16 %v218
    %v565 = vunpack.c.l.b16 %v219
    %v566 = vunpack.c.h.b16 %v219
    %v567 = vunpack.c.l.b16 %v220
    %v568 = vunpack.c.h.b16 %v220
    %v569 = vunpack.c.l.b16 %v221
    %v570 = vunpack.c.h.b16 %v221
    %v571 = vunpack.c.l.b16 %v222
    %v572 = vunpack.c.h.b16 %v222
    %v573 = vunpack.c.l.b16 %v223
    %v574 = vunpack.c.h.b16 %v223
    %v575 = vunpack.c.l.b16 %v224
    %v576 = vunpack.c.h.b16 %v224
    %v577 = vunpack.c.l.b16 %v225
    %v578 = vunpack.c.h.b16 %v225
    %v579 = vunpack.c.l.b16 %v226
    %v580 = vunpack.c.h.b16 %v226
    %v581 = vunpack.c.l.b16 %v227
    %v582 = vunpack.c.h.b16 %v227
    %v583 = vunpack.c.l.b16 %v228
    %v584 = vunpack.c.h.b16 %v228
    %v585 = vunpack.c.l.b16 %v229
    %v586 = vunpack.c.h.b16 %v229
    %v587 = vunpack.c.l.b16 %v230
    %v588 = vunpack.c.h.b16 %v230
    %v589 = vunpack.c.l.b16 %v231
    %v590 = vunpack.c.h.b16 %v231
    %v591 = vunpack.c.l.b16 %v232
    %v592 = vunpack.c.h.b16 %v232
    %v593 = vunpack.c.l.b16 %v233
    %v594 = vunpack.c.h.b16 %v233
    %v595 = vunpack.c.l.b16 %v234
    %v596 = vunpack.c.h.b16 %v234
    %v597 = vunpack.c.l.b16 %v235
    %v598 = vunpack.c.h.b16 %v235
    %v599 = vunpack.c.l.b16 %v236
    %v600 = vunpack.c.h.b16 %v236
    %v601 = vunpack.c.l.b16 %v237
    %v602 = vunpack.c.h.b16 %v237
    %v603 = vunpack.c.l.b16 %v238
    %v604 = vunpack.c.h.b16 %v238
    %v605 = vunpack.c.l.b16 %v239
    %v606 = vunpack.c.h.b16 %v239
    %v607 = vunpack.c.l.b16 %v240
    %v608 = vunpack.c.h.b16 %v240
    %v609 = vunpack.c.l.b16 %v241
    %v610 = vunpack.c.h.b16 %v241
    %v611 = vunpack.c.l.b16 %v242
    %v612 = vunpack.c.h.b16 %v242
    %v613 = vunpack.c.l.b16 %v243
    %v614 = vunpack.c.h.b16 %v243
    %v615 = vunpack.c.l.b16 %v244
    %v616 = vunpack.c.h.b16 %v244
    %v617 = vunpack.c.l.b16 %v245
    %v618 = vunpack.c.h.b16 %v245
    %v619 = vunpack.c.l.b16 %v246
    %v620 = vunpack.c.h.b16 %v246
    %v621 = vunpack.c.l.b16 %v247
    %v622 = vunpack.c.h.b16 %v247
    %v623 = vunpack.c.l.b16 %v248
    %v624 = vunpack.c.h.b16 %v248
    %v625 = vunpack.c.l.b16 %v249
    %v626 = vunpack.c.h.b16 %v249
    %v627 = vunpack.c.l.b16 %v250
    %v628 = vunpack.c.h.b16 %v250
    %v629 = vunpack.c.l.b16 %v251
    %v630 = vunpack.c.h.b16 %v251
    %v631 = vunpack.c.l.b16 %v252
    %v632 = vunpack.c.h.b16 %v252
    %v633 = vunpack.c.l.b16 %v253
    %v634 = vunpack.c.h.b16 %v253
    %v635 = vunpack.c.l.b16 %v254
    %v636 = vunpack.c.h.b16 %v254
    %v637 = vunpack.c.l.b16 %v255
    %v638 = vunpack.c.h.b16 %v255
    %v639 = vunpack.c.l.b16 %v256
    %v640 = vunpack.c.h.b16 %v256
    %v641 = vunpack.c.l.b16 %v257
    %v642 = vunpack.c.h.b16 %v257
    %v643 = vunpack.c.l.b16 %v258
    %v644 = vunpack.c.h.b16 %v258
    %v645 = vunpack.c.l.b16 %v259
    %v646 = vunpack.c.h.b16 %v259
    %v647 = vunpack.c.l.b16 %v260
    %v648 = vunpack.c.h.b16 %v260
    %v649 = vunpack.c.l.b16 %v261
    %v650 = vunpack.c.h.b16 %v261
    %v651 = vunpack.c.l.b16 %v262
    %v652 = vunpack.c.h.b16 %v262
    %v653 = vunpack.c.l.b16 %v263
    %v654 = vunpack.c.h.b16 %v263
    %v655 = vunpack.c.l.b16 %v264
    %v656 = vunpack.c.h.b16 %v264
    %v657 = vunpack.c.l.b16 %v265
    %v658 = vunpack.c.h.b16 %v265
    %v659 = vunpack.c.l.b16 %v266
    %v660 = vunpack.c.h.b16 %v266
    %v661 = vunpack.c.l.b16 %v267
    %v662 = vunpack.c.h.b16 %v267
    %v663 = vunpack.c.l.b16 %v268
    %v664 = vunpack.c.h.b16 %v268
    %v665 = vpack.c.b16 %v411, %v409
    %v666 = vpack.c.b16 %v412, %v410
    %v667 = vpack.c.b16 %v415, %v413
    %v668 = vpack.c.b16 %v416, %v414
    %v669 = vpack.c.b16 %v419, %v417
    %v670 = vpack.c.b16 %v420, %v418
    %v671 = vpack.c.b16 %v423, %v421
    %v672 = vpack.c.b16 %v424, %v422
    %v673 = vpack.c.b16 %v427, %v425
    %v674 = vpack.c.b16 %v428, %v426
    %v675 = vpack.c.b16 %v431, %v429
    %v676 = vpack.c.b16 %v432, %v430
    %v677 = vpack.c.b16 %v435, %v433
    %v678 = vpack.c.b16 %v436, %v434
    %v679 = vpack.c.b16 %v439, %v437
    %v680 = vpack.c.b16 %v440, %v438
    %v681 = vpack.c.b16 %v443, %v441
    %v682 = vpack.c.b16 %v444, %v442
    %v683 = vpack.c.b16 %v447, %v445
    %v684 = vpack.c.b16 %v448, %v446
    %v685 = vpack.c.b16 %v451, %v449
    %v686 = vpack.c.b16 %v452, %v450
    %v687 = vpack.c.b16 %v455, %v453
    %v688 = vpack.c.b16 %v456, %v454
    %v689 = vpack.c.b16 %v459, %v457
    %v690 = vpack.c.b16 %v460, %v458
    %v691 = vpack.c.b16 %v463, %v461
    %v692 = vpack.c.b16 %v464, %v462
    %v693 = vpack.c.b16 %v467, %v465
    %v694 = vpack.c.b16 %v468, %v466
    %v695 = vpack.c.b16 %v471, %v469
    %v696 = vpack.c.b16 %v472, %v470
    %v697 = vpack.c.b16 %v475, %v473
    %v698 = vpack.c.b16 %v476, %v474
    %v699 = vpack.c.b16 %v479, %v477
    %v700 = vpack.c.b16 %v480, %v478
    %v701 = vpack.c.b16 %v483, %v481
    %v702 = vpack.c.b16 %v484, %v482
    %v703 = vpack.c.b16 %v487, %v485
    %v704 = vpack.c.b16 %v488, %v486
    %v705 = vpack.c.b16 %v491, %v489
    %v706 = vpack.c.b16 %v492, %v490
    %v707 = vpack.c.b16 %v495, %v493
    %v708 = vpack.c.b16 %v496, %v494
    %v709 = vpack.c.b16 %v499, %v497
    %v710 = vpack.c.b16 %v500, %v498
    %v711 = vpack.c.b16 %v503, %v501
    %v712 = vpack.c.b16 %v504, %v502
    %v713 = vpack.c.b16 %v507, %v505
    %v714 = vpack.c.b16 %v508, %v506
    %v715 = vpack.c.b16 %v511, %v509
    %v716 = vpack.c.b16 %v512, %v510
    %v717 = vpack.c.b16 %v515, %v513
    %v718 = vpack.c.b16 %v516, %v514
    %v719 = vpack.c.b16 %v519, %v517
    %v720 = vpack.c.b16 %v520, %v518
    %v721 = vpack.c.b16 %v523, %v521
    %v722 = vpack.c.b16 %v524, %v522
    %v723 = vpack.c.b16 %v527, %v525
    %v724 = vpack.c.b16 %v528, %v526
    %v725 = vpack.c.b16 %v531, %v529
    %v726 = vpack.c.b16 %v532, %v530
    %v727 = vpack.c.b16 %v535, %v533
    %v728 = vpack.c.b16 %v536, %v534
    %v729 = vpack.c.b16 %v539, %v537
    %v730 = vpack.c.b16 %v540, %v538
    %v731 = vpack.c.b16 %v543, %v541
    %v732 = vpack.c.b16 %v544, %v542
    %v733 = vpack.c.b16 %v547, %v545
    %v734 = vpack.c.b16 %v548, %v546
    %v735 = vpack.c.b16 %v551, %v549
    %v736 = vpack.c.b16 %v552, %v550
    %v737 = vpack.c.b16 %v555, %v553
    %v738 = vpack.c.b16 %v556, %v554
    %v739 = vpack.c.b16 %v559, %v557
    %v740 = vpack.c.b16 %v560, %v558
    %v741 = vpack.c.b16 %v563, %v561
    %v742 = vpack.c.b16 %v564, %v562
    %v743 = vpack.c.b16 %v567, %v565
    %v744 = vpack.c.b16 %v568, %v566
    %v745 = vpack.c.b16 %v571, %v569
    %v746 = vpack.c.b16 %v572, %v570
    %v747 = vpack.c.b16 %v575, %v573
    %v748 = vpack.c.b16 %v576, %v574
    %v749 = vpack.c.b16 %v579, %v577
    %v750 = vpack.c.b16 %v580, %v578
    %v751 = vpack.c.b16 %v583, %v581
    %v752 = vpack.c.b16 %v584, %v582
    %v753 = vpack.c.b16 %v587, %v585
    %v754 = vpack.c.b16 %v588, %v586
    %v755 = vpack.c.b16 %v591, %v589
    %v756 = vpack.c.b16 %v592, %v590
    %v757 = vpack.c.b16 %v595, %v593
    %v758 = vpack.c.b16 %v596, %v594
    %v759 = vpack.c.b16 %v599, %v597
    %v760 = vpack.c.b16 %v600, %v598
    %v761 = vpack.c.b16 %v603, %v601
    %v762 = vpack.c.b16 %v604, %v602
    %v763 = vpack.c.b16 %v607, %v605
    %v764 = vpack.c.b16 %v608, %v606
    %v765 = vpack.c.b16 %v611, %v609
    %v766 = vpack.c.b16 %v612, %v610
    %v767 = vpack.c.b16 %v615, %v613
    %v768 = vpack.c.b16 %v616, %v614
    %v769 = vpack.c.b16 %v619, %v617
    %v770 = vpack.c.b16 %v620, %v618
    %v771 = vpack.c.b16 %v623, %v621
    %v772 = vpack.c.b16 %v624, %v622
    %v773 = vpack.c.b16 %v627, %v625
    %v774 = vpack.c.b16 %v628, %v626
    %v775 = vpack.c.b16 %v631, %v629
    %v776 = vpack.c.b16 %v632, %v630
    %v777 = vpack.c.b16 %v635, %v633
    %v778 = vpack.c.b16 %v636, %v634
    %v779 = vpack.c.b16 %v639, %v637
    %v780 = vpack.c.b16 %v640, %v638
    %v781 = vpack.c.b16 %v643, %v641
    %v782 = vpack.c.b16 %v644, %v642
    %v783 = vpack.c.b16 %v647, %v645
    %v784 = vpack.c.b16 %v648, %v646
    %v785 = vpack.c.b16 %v651, %v649
    %v786 = vpack.c.b16 %v652, %v650
    %v787 = vpack.c.b16 %v655, %v653
    %v788 = vpack.c.b16 %v656, %v654
    %v789 = vpack.c.b16 %v659, %v657
    %v790 = vpack.c.b16 %v660, %v658
    %v791 = vpack.c.b16 %v663, %v661
    %v792 = vpack.c.b16 %v664, %v662
    %921 = vmatprep.subr.bf16.mxu0 %v680
    %922 = vmatpush1.bf16.msra.mxu0 %v679
    %923 = vmatprep.subr.bf16.mxu0 %v678
    %924 = vmatpush1.bf16.msra.mxu0 %v677
    %925 = vmatprep.subr.bf16.mxu0 %v676
    %926 = vmatpush1.bf16.msra.mxu0 %v675
    %927 = vmatprep.subr.bf16.mxu0 %v674
    %928 = vmatpush1.bf16.msra.mxu0 %v673
    %929 = vmatprep.subr.bf16.mxu0 %v672
    %930 = vmatpush1.bf16.msra.mxu0 %v671
    %931 = vmatprep.subr.bf16.mxu0 %v670
    %932 = vmatpush1.bf16.msra.mxu0 %v669
    %933 = vmatprep.subr.bf16.mxu0 %v668
    %934 = vmatpush1.bf16.msra.mxu0 %v667
    %935 = vmatprep.subr.bf16.mxu0 %v666
    %936 = vmatpush1.bf16.msra.mxu0 %v665
    %937 = vmatprep.subr.bf16.mxu0 %v696
    %938 = vmatpush2.bf16.msra.mxu0 %v695
    %939 = vmatprep.subr.bf16.mxu0 %v694
    %940 = vmatpush2.bf16.msra.mxu0 %v693
    %941 = vmatprep.subr.bf16.mxu0 %v692
    %942 = vmatpush2.bf16.msra.mxu0 %v691
    %943 = vmatprep.subr.bf16.mxu0 %v690
    %944 = vmatpush2.bf16.msra.mxu0 %v689
    %945 = vmatprep.subr.bf16.mxu0 %v688
    %946 = vmatpush2.bf16.msra.mxu0 %v687
    %947 = vmatprep.subr.bf16.mxu0 %v686
    %948 = vmatpush2.bf16.msra.mxu0 %v685
    %949 = vmatprep.subr.bf16.mxu0 %v684
    %950 = vmatpush2.bf16.msra.mxu0 %v683
    %951 = vmatprep.subr.bf16.mxu0 %v682
    %952 = vmatpush2.bf16.msra.mxu0 %v681
    %953 = vmatprep.mubr.bf16.mxu0 %v134
    %954 = vmatmul.mubr.bf16.gmra.mxu0 %v133
    %v955 = vpop.f32.mrf.mxu0
    %v956 = vadd.f32 %v274, %v955
    %v957 = vpop.f32.mrf.mxu0
    %v958 = vadd.f32 %v278, %v957
    %v959 = vpop.f32.mrf.mxu0
    %v960 = vpop.f32.mrf.mxu0
    %961 = vdwg.mxu0
    %962 = vmatprep.subr.bf16.mxu0 %v712
    %963 = vmatpush1.bf16.msra.mxu0 %v711
    %964 = vmatprep.subr.bf16.mxu0 %v710
    %965 = vmatpush1.bf16.msra.mxu0 %v709
    %966 = vmatprep.subr.bf16.mxu0 %v708
    %967 = vmatpush1.bf16.msra.mxu0 %v707
    %968 = vmatprep.subr.bf16.mxu0 %v706
    %969 = vmatpush1.bf16.msra.mxu0 %v705
    %970 = vmatprep.subr.bf16.mxu0 %v704
    %971 = vmatpush1.bf16.msra.mxu0 %v703
    %972 = vmatprep.subr.bf16.mxu0 %v702
    %973 = vmatpush1.bf16.msra.mxu0 %v701
    %974 = vmatprep.subr.bf16.mxu0 %v700
    %975 = vmatpush1.bf16.msra.mxu0 %v699
    %976 = vmatprep.subr.bf16.mxu0 %v698
    %977 = vmatpush1.bf16.msra.mxu0 %v697
    %978 = vmatprep.subr.bf16.mxu0 %v728
    %979 = vmatpush2.bf16.msra.mxu0 %v727
    %980 = vmatprep.subr.bf16.mxu0 %v726
    %981 = vmatpush2.bf16.msra.mxu0 %v725
    %982 = vmatprep.subr.bf16.mxu0 %v724
    %983 = vmatpush2.bf16.msra.mxu0 %v723
    %984 = vmatprep.subr.bf16.mxu0 %v722
    %985 = vmatpush2.bf16.msra.mxu0 %v721
    %986 = vmatprep.subr.bf16.mxu0 %v720
    %987 = vmatpush2.bf16.msra.mxu0 %v719
    %988 = vmatprep.subr.bf16.mxu0 %v718
    %989 = vmatpush2.bf16.msra.mxu0 %v717
    %990 = vmatprep.subr.bf16.mxu0 %v716
    %991 = vmatpush2.bf16.msra.mxu0 %v715
    %992 = vmatprep.subr.bf16.mxu0 %v714
    %993 = vmatpush2.bf16.msra.mxu0 %v713
    %994 = vmatprep.mubr.bf16.mxu0 %v136
    %995 = vmatmul.mubr.bf16.gmra.mxu0 %v135
    %v996 = vpop.f32.mrf.mxu0
    %v997 = vadd.f32 %v956, %v996
    %v998 = vpop.f32.mrf.mxu0
    %v999 = vadd.f32 %v958, %v998
    %v1000 = vpop.f32.mrf.mxu0
    %v1001 = vpop.f32.mrf.mxu0
    %1002 = vdwg.mxu0
    %1003 = vmatprep.subr.bf16.mxu0 %v744
    %1004 = vmatpush1.bf16.msra.mxu0 %v743
    %1005 = vmatprep.subr.bf16.mxu0 %v742
    %1006 = vmatpush1.bf16.msra.mxu0 %v741
    %1007 = vmatprep.subr.bf16.mxu0 %v740
    %1008 = vmatpush1.bf16.msra.mxu0 %v739
    %1009 = vmatprep.subr.bf16.mxu0 %v738
    %1010 = vmatpush1.bf16.msra.mxu0 %v737
    %1011 = vmatprep.subr.bf16.mxu0 %v736
    %1012 = vmatpush1.bf16.msra.mxu0 %v735
    %1013 = vmatprep.subr.bf16.mxu0 %v734
    %1014 = vmatpush1.bf16.msra.mxu0 %v733
    %1015 = vmatprep.subr.bf16.mxu0 %v732
    %1016 = vmatpush1.bf16.msra.mxu0 %v731
    %1017 = vmatprep.subr.bf16.mxu0 %v730
    %1018 = vmatpush1.bf16.msra.mxu0 %v729
    %1019 = vmatprep.subr.bf16.mxu0 %v760
    %1020 = vmatpush2.bf16.msra.mxu0 %v759
    %1021 = vmatprep.subr.bf16.mxu0 %v758
    %1022 = vmatpush2.bf16.msra.mxu0 %v757
    %1023 = vmatprep.subr.bf16.mxu0 %v756
    %1024 = vmatpush2.bf16.msra.mxu0 %v755
    %1025 = vmatprep.subr.bf16.mxu0 %v754
    %1026 = vmatpush2.bf16.msra.mxu0 %v753
    %1027 = vmatprep.subr.bf16.mxu0 %v752
    %1028 = vmatpush2.bf16.msra.mxu0 %v751
    %1029 = vmatprep.subr.bf16.mxu0 %v750
    %1030 = vmatpush2.bf16.msra.mxu0 %v749
    %1031 = vmatprep.subr.bf16.mxu0 %v748
    %1032 = vmatpush2.bf16.msra.mxu0 %v747
    %1033 = vmatprep.subr.bf16.mxu0 %v746
    %1034 = vmatpush2.bf16.msra.mxu0 %v745
    %1035 = vmatprep.mubr.bf16.mxu0 %v138
    %1036 = vmatmul.mubr.bf16.gmra.mxu0 %v137
    %v1037 = vpop.f32.mrf.mxu0
    %v1038 = vadd.f32 %v997, %v1037
    %v1039 = vpop.f32.mrf.mxu0
    %v1040 = vadd.f32 %v999, %v1039
    %v1041 = vpop.f32.mrf.mxu0
    %v1042 = vpop.f32.mrf.mxu0
    %1043 = vdwg.mxu0
    %1044 = vmatprep.subr.bf16.mxu0 %v776
    %1045 = vmatpush1.bf16.msra.mxu0 %v775
    %1046 = vmatprep.subr.bf16.mxu0 %v774
    %1047 = vmatpush1.bf16.msra.mxu0 %v773
    %1048 = vmatprep.subr.bf16.mxu0 %v772
    %1049 = vmatpush1.bf16.msra.mxu0 %v771
    %1050 = vmatprep.subr.bf16.mxu0 %v770
    %1051 = vmatpush1.bf16.msra.mxu0 %v769
    %1052 = vmatprep.subr.bf16.mxu0 %v768
    %1053 = vmatpush1.bf16.msra.mxu0 %v767
    %1054 = vmatprep.subr.bf16.mxu0 %v766
    %1055 = vmatpush1.bf16.msra.mxu0 %v765
    %1056 = vmatprep.subr.bf16.mxu0 %v764
    %1057 = vmatpush1.bf16.msra.mxu0 %v763
    %1058 = vmatprep.subr.bf16.mxu0 %v762
    %1059 = vmatpush1.bf16.msra.mxu0 %v761
    %1060 = vmatprep.subr.bf16.mxu0 %v792
    %1061 = vmatpush2.bf16.msra.mxu0 %v791
    %1062 = vmatprep.subr.bf16.mxu0 %v790
    %1063 = vmatpush2.bf16.msra.mxu0 %v789
    %1064 = vmatprep.subr.bf16.mxu0 %v788
    %1065 = vmatpush2.bf16.msra.mxu0 %v787
    %1066 = vmatprep.subr.bf16.mxu0 %v786
    %1067 = vmatpush2.bf16.msra.mxu0 %v785
    %1068 = vmatprep.subr.bf16.mxu0 %v784
    %1069 = vmatpush2.bf16.msra.mxu0 %v783
    %1070 = vmatprep.subr.bf16.mxu0 %v782
    %1071 = vmatpush2.bf16.msra.mxu0 %v781
    %1072 = vmatprep.subr.bf16.mxu0 %v780
    %1073 = vmatpush2.bf16.msra.mxu0 %v779
    %1074 = vmatprep.subr.bf16.mxu0 %v778
    %1075 = vmatpush2.bf16.msra.mxu0 %v777
    %1076 = vmatprep.mubr.bf16.mxu0 %v140
    %1077 = vmatmul.mubr.bf16.gmra.mxu0 %v139
    %v1078 = vpop.f32.mrf.mxu0
    %v1079 = vadd.f32 %v1038, %v1078
    %v1080 = vpop.f32.mrf.mxu0
    %v1081 = vadd.f32 %v1040, %v1080
    %v1082 = vpop.f32.mrf.mxu0
    %v1083 = vpop.f32.mrf.mxu0
    %1084 = vdwg.mxu0
    %vm1085 = vcmp.gt.f32.partialorder %v1079, 0.0
    %vm1086 = vcmp.gt.f32.partialorder %v1081, 0.0
    %v1087 = vmin.f32 %v1079, 0.0
    %v1088 = vmin.f32 %v1081, 0.0
    %v1089 = vmul.f32 %v1087, 1.442695
    %v1090 = vpow.pop %v1089
    %v1091 = vmul.f32 %v1088, 1.442695
    %v1092 = vpow.pop %v1091
    %v1093 = vsub.f32 %v1090, 1.0
    %v1094 = vsub.f32 %v1092, 1.0
    %v1095 = vsel %vm1085, %v1079, %v1093
    %v1096 = vsel %vm1086, %v1081, %v1094
    %v1097 = vpack.c.bf16 %v1095, %v1095
    %v1098 = vpack.c.bf16 %v1096, %v1096
    %v1099 = vld [vmem:[%s4] sm:$0xff]
    %v1100 = vld [vmem:[%s4 + $0x8] sm:$0xff]
    %v1101 = vld [vmem:[%s4 + $0x10] sm:$0xff]
    %v1102 = vld [vmem:[%s4 + $0x18] sm:$0xff]
    %v1103 = vld [vmem:[%s4 + $0x20] sm:$0xff]
    %v1104 = vld [vmem:[%s4 + $0x28] sm:$0xff]
    %v1105 = vld [vmem:[%s4 + $0x30] sm:$0xff]
    %v1106 = vld [vmem:[%s4 + $0x38] sm:$0xff]
    %v1107 = vld [vmem:[%s4 + $0x40] sm:$0xff]
    %v1108 = vld [vmem:[%s4 + $0x48] sm:$0xff]
    %v1109 = vld [vmem:[%s4 + $0x50] sm:$0xff]
    %v1110 = vld [vmem:[%s4 + $0x58] sm:$0xff]
    %v1111 = vld [vmem:[%s4 + $0x60] sm:$0xff]
    %v1112 = vld [vmem:[%s4 + $0x68] sm:$0xff]
    %v1113 = vld [vmem:[%s4 + $0x70] sm:$0xff]
    %v1114 = vld [vmem:[%s4 + $0x78] sm:$0xff]
    %v1115 = vld [vmem:[%s4 + $0x80] sm:$0xff]
    %v1116 = vld [vmem:[%s4 + $0x88] sm:$0xff]
    %v1117 = vld [vmem:[%s4 + $0x90] sm:$0xff]
    %v1118 = vld [vmem:[%s4 + $0x98] sm:$0xff]
    %v1119 = vld [vmem:[%s4 + $0xa0] sm:$0xff]
    %v1120 = vld [vmem:[%s4 + $0xa8] sm:$0xff]
    %v1121 = vld [vmem:[%s4 + $0xb0] sm:$0xff]
    %v1122 = vld [vmem:[%s4 + $0xb8] sm:$0xff]
    %v1123 = vld [vmem:[%s4 + $0xc0] sm:$0xff]
    %v1124 = vld [vmem:[%s4 + $0xc8] sm:$0xff]
    %v1125 = vld [vmem:[%s4 + $0xd0] sm:$0xff]
    %v1126 = vld [vmem:[%s4 + $0xd8] sm:$0xff]
    %v1127 = vld [vmem:[%s4 + $0xe0] sm:$0xff]
    %v1128 = vld [vmem:[%s4 + $0xe8] sm:$0xff]
    %v1129 = vld [vmem:[%s4 + $0xf0] sm:$0xff]
    %v1130 = vld [vmem:[%s4 + $0xf8] sm:$0xff]
    %v1131 = vld [vmem:[%s5] sm:$0x3]
    %v1133 = vlaneseq
    %v1134 = vshrl.u32 %v1133, 7
    %v1135 = vsub.s32 0, %v1134
    %v1136 = vrot.slane %v1131, %v1135
    %v1137 = vlaneseq
    %v1138 = vshrl.u32 %v1137, 7
    %v1139 = vsub.s32 1, %v1138
    %v1140 = vrot.slane %v1131, %v1139
    %v1175 = vunpack.c.l.b16 %v1099
    %v1176 = vunpack.c.h.b16 %v1099
    %v1177 = vunpack.c.l.b16 %v1100
    %v1178 = vunpack.c.h.b16 %v1100
    %v1179 = vunpack.c.l.b16 %v1101
    %v1180 = vunpack.c.h.b16 %v1101
    %v1181 = vunpack.c.l.b16 %v1102
    %v1182 = vunpack.c.h.b16 %v1102
    %v1183 = vunpack.c.l.b16 %v1103
    %v1184 = vunpack.c.h.b16 %v1103
    %v1185 = vunpack.c.l.b16 %v1104
    %v1186 = vunpack.c.h.b16 %v1104
    %v1187 = vunpack.c.l.b16 %v1105
    %v1188 = vunpack.c.h.b16 %v1105
    %v1189 = vunpack.c.l.b16 %v1106
    %v1190 = vunpack.c.h.b16 %v1106
    %v1191 = vunpack.c.l.b16 %v1107
    %v1192 = vunpack.c.h.b16 %v1107
    %v1193 = vunpack.c.l.b16 %v1108
    %v1194 = vunpack.c.h.b16 %v1108
    %v1195 = vunpack.c.l.b16 %v1109
    %v1196 = vunpack.c.h.b16 %v1109
    %v1197 = vunpack.c.l.b16 %v1110
    %v1198 = vunpack.c.h.b16 %v1110
    %v1199 = vunpack.c.l.b16 %v1111
    %v1200 = vunpack.c.h.b16 %v1111
    %v1201 = vunpack.c.l.b16 %v1112
    %v1202 = vunpack.c.h.b16 %v1112
    %v1203 = vunpack.c.l.b16 %v1113
    %v1204 = vunpack.c.h.b16 %v1113
    %v1205 = vunpack.c.l.b16 %v1114
    %v1206 = vunpack.c.h.b16 %v1114
    %v1207 = vunpack.c.l.b16 %v1115
    %v1208 = vunpack.c.h.b16 %v1115
    %v1209 = vunpack.c.l.b16 %v1116
    %v1210 = vunpack.c.h.b16 %v1116
    %v1211 = vunpack.c.l.b16 %v1117
    %v1212 = vunpack.c.h.b16 %v1117
    %v1213 = vunpack.c.l.b16 %v1118
    %v1214 = vunpack.c.h.b16 %v1118
    %v1215 = vunpack.c.l.b16 %v1119
    %v1216 = vunpack.c.h.b16 %v1119
    %v1217 = vunpack.c.l.b16 %v1120
    %v1218 = vunpack.c.h.b16 %v1120
    %v1219 = vunpack.c.l.b16 %v1121
    %v1220 = vunpack.c.h.b16 %v1121
    %v1221 = vunpack.c.l.b16 %v1122
    %v1222 = vunpack.c.h.b16 %v1122
    %v1223 = vunpack.c.l.b16 %v1123
    %v1224 = vunpack.c.h.b16 %v1123
    %v1225 = vunpack.c.l.b16 %v1124
    %v1226 = vunpack.c.h.b16 %v1124
    %v1227 = vunpack.c.l.b16 %v1125
    %v1228 = vunpack.c.h.b16 %v1125
    %v1229 = vunpack.c.l.b16 %v1126
    %v1230 = vunpack.c.h.b16 %v1126
    %v1231 = vunpack.c.l.b16 %v1127
    %v1232 = vunpack.c.h.b16 %v1127
    %v1233 = vunpack.c.l.b16 %v1128
    %v1234 = vunpack.c.h.b16 %v1128
    %v1235 = vunpack.c.l.b16 %v1129
    %v1236 = vunpack.c.h.b16 %v1129
    %v1237 = vunpack.c.l.b16 %v1130
    %v1238 = vunpack.c.h.b16 %v1130
    %v1239 = vpack.c.b16 %v1177, %v1175
    %v1240 = vpack.c.b16 %v1178, %v1176
    %v1241 = vpack.c.b16 %v1181, %v1179
    %v1242 = vpack.c.b16 %v1182, %v1180
    %v1243 = vpack.c.b16 %v1185, %v1183
    %v1244 = vpack.c.b16 %v1186, %v1184
    %v1245 = vpack.c.b16 %v1189, %v1187
    %v1246 = vpack.c.b16 %v1190, %v1188
    %v1247 = vpack.c.b16 %v1193, %v1191
    %v1248 = vpack.c.b16 %v1194, %v1192
    %v1249 = vpack.c.b16 %v1197, %v1195
    %v1250 = vpack.c.b16 %v1198, %v1196
    %v1251 = vpack.c.b16 %v1201, %v1199
    %v1252 = vpack.c.b16 %v1202, %v1200
    %v1253 = vpack.c.b16 %v1205, %v1203
    %v1254 = vpack.c.b16 %v1206, %v1204
    %v1255 = vpack.c.b16 %v1209, %v1207
    %v1256 = vpack.c.b16 %v1210, %v1208
    %v1257 = vpack.c.b16 %v1213, %v1211
    %v1258 = vpack.c.b16 %v1214, %v1212
    %v1259 = vpack.c.b16 %v1217, %v1215
    %v1260 = vpack.c.b16 %v1218, %v1216
    %v1261 = vpack.c.b16 %v1221, %v1219
    %v1262 = vpack.c.b16 %v1222, %v1220
    %v1263 = vpack.c.b16 %v1225, %v1223
    %v1264 = vpack.c.b16 %v1226, %v1224
    %v1265 = vpack.c.b16 %v1229, %v1227
    %v1266 = vpack.c.b16 %v1230, %v1228
    %v1267 = vpack.c.b16 %v1233, %v1231
    %v1268 = vpack.c.b16 %v1234, %v1232
    %v1269 = vpack.c.b16 %v1237, %v1235
    %v1270 = vpack.c.b16 %v1238, %v1236
    %1303 = vmatprep.subr.bf16.mxu0 %v1254
    %1304 = vmatpush1.bf16.msra.mxu0 %v1253
    %1305 = vmatprep.subr.bf16.mxu0 %v1252
    %1306 = vmatpush1.bf16.msra.mxu0 %v1251
    %1307 = vmatprep.subr.bf16.mxu0 %v1250
    %1308 = vmatpush1.bf16.msra.mxu0 %v1249
    %1309 = vmatprep.subr.bf16.mxu0 %v1248
    %1310 = vmatpush1.bf16.msra.mxu0 %v1247
    %1311 = vmatprep.subr.bf16.mxu0 %v1246
    %1312 = vmatpush1.bf16.msra.mxu0 %v1245
    %1313 = vmatprep.subr.bf16.mxu0 %v1244
    %1314 = vmatpush1.bf16.msra.mxu0 %v1243
    %1315 = vmatprep.subr.bf16.mxu0 %v1242
    %1316 = vmatpush1.bf16.msra.mxu0 %v1241
    %1317 = vmatprep.subr.bf16.mxu0 %v1240
    %1318 = vmatpush1.bf16.msra.mxu0 %v1239
    %1319 = vmatprep.subr.bf16.mxu0 %v1270
    %1320 = vmatpush2.bf16.msra.mxu0 %v1269
    %1321 = vmatprep.subr.bf16.mxu0 %v1268
    %1322 = vmatpush2.bf16.msra.mxu0 %v1267
    %1323 = vmatprep.subr.bf16.mxu0 %v1266
    %1324 = vmatpush2.bf16.msra.mxu0 %v1265
    %1325 = vmatprep.subr.bf16.mxu0 %v1264
    %1326 = vmatpush2.bf16.msra.mxu0 %v1263
    %1327 = vmatprep.subr.bf16.mxu0 %v1262
    %1328 = vmatpush2.bf16.msra.mxu0 %v1261
    %1329 = vmatprep.subr.bf16.mxu0 %v1260
    %1330 = vmatpush2.bf16.msra.mxu0 %v1259
    %1331 = vmatprep.subr.bf16.mxu0 %v1258
    %1332 = vmatpush2.bf16.msra.mxu0 %v1257
    %1333 = vmatprep.subr.bf16.mxu0 %v1256
    %1334 = vmatpush2.bf16.msra.mxu0 %v1255
    %1335 = vmatprep.mubr.bf16.mxu0 %v1098
    %1336 = vmatmul.mubr.bf16.gmra.mxu0 %v1097
    %v1337 = vpop.f32.mrf.mxu0
    %v1338 = vadd.f32 %v1136, %v1337
    %v1339 = vpop.f32.mrf.mxu0
    %v1340 = vadd.f32 %v1140, %v1339
    %v1341 = vpop.f32.mrf.mxu0
    %v1342 = vpop.f32.mrf.mxu0
    %1343 = vdwg.mxu0
    %vm1344 = vcmp.gt.f32.partialorder %v1338, 0.0
    %vm1345 = vcmp.gt.f32.partialorder %v1340, 0.0
    %v1346 = vmin.f32 %v1338, 0.0
    %v1347 = vmin.f32 %v1340, 0.0
    %v1348 = vmul.f32 %v1346, 1.442695
    %v1349 = vpow.pop %v1348
    %v1350 = vmul.f32 %v1347, 1.442695
    %v1351 = vpow.pop %v1350
    %v1352 = vsub.f32 %v1349, 1.0
    %v1353 = vsub.f32 %v1351, 1.0
    %v1354 = vsel %vm1344, %v1338, %v1352
    %v1355 = vsel %vm1345, %v1340, %v1353
    %v1356 = vpack.c.bf16 %v1354, %v1354
    %v1357 = vpack.c.bf16 %v1355, %v1355
    %v1358 = vld [vmem:[%s6] sm:$0xf]
    %v1359 = vld [vmem:[%s6 + $0x4] sm:$0xf]
    %v1360 = vld [vmem:[%s6 + $0x8] sm:$0xf]
    %v1361 = vld [vmem:[%s6 + $0xc] sm:$0xf]
    %v1362 = vld [vmem:[%s6 + $0x10] sm:$0xf]
    %v1363 = vld [vmem:[%s6 + $0x14] sm:$0xf]
    %v1364 = vld [vmem:[%s6 + $0x18] sm:$0xf]
    %v1365 = vld [vmem:[%s6 + $0x1c] sm:$0xf]
    %v1366 = vld [vmem:[%s6 + $0x20] sm:$0xf]
    %v1367 = vld [vmem:[%s6 + $0x24] sm:$0xf]
    %v1368 = vld [vmem:[%s6 + $0x28] sm:$0xf]
    %v1369 = vld [vmem:[%s6 + $0x2c] sm:$0xf]
    %v1370 = vld [vmem:[%s6 + $0x30] sm:$0xf]
    %v1371 = vld [vmem:[%s6 + $0x34] sm:$0xf]
    %v1372 = vld [vmem:[%s6 + $0x38] sm:$0xf]
    %v1373 = vld [vmem:[%s6 + $0x3c] sm:$0xf]
    %v1374 = vld [vmem:[%s6 + $0x40] sm:$0xf]
    %v1375 = vld [vmem:[%s6 + $0x44] sm:$0xf]
    %v1376 = vld [vmem:[%s6 + $0x48] sm:$0xf]
    %v1377 = vld [vmem:[%s6 + $0x4c] sm:$0xf]
    %v1378 = vld [vmem:[%s6 + $0x50] sm:$0xf]
    %v1379 = vld [vmem:[%s6 + $0x54] sm:$0xf]
    %v1380 = vld [vmem:[%s6 + $0x58] sm:$0xf]
    %v1381 = vld [vmem:[%s6 + $0x5c] sm:$0xf]
    %v1382 = vld [vmem:[%s7] sm:$0x1]
    %v1384 = vlaneseq
    %v1385 = vshrl.u32 %v1384, 7
    %v1386 = vsub.s32 0, %v1385
    %v1387 = vrot.slane %v1382, %v1386
    %v1413 = vunpack.c.l.b16 %v1358
    %v1414 = vunpack.c.l.b16 %v1359
    %v1415 = vunpack.c.l.b16 %v1360
    %v1416 = vunpack.c.l.b16 %v1361
    %v1417 = vunpack.c.l.b16 %v1362
    %v1418 = vunpack.c.l.b16 %v1363
    %v1419 = vunpack.c.l.b16 %v1364
    %v1420 = vunpack.c.l.b16 %v1365
    %v1421 = vunpack.c.l.b16 %v1366
    %v1422 = vunpack.c.l.b16 %v1367
    %v1423 = vunpack.c.l.b16 %v1368
    %v1424 = vunpack.c.l.b16 %v1369
    %v1425 = vunpack.c.l.b16 %v1370
    %v1426 = vunpack.c.l.b16 %v1371
    %v1427 = vunpack.c.l.b16 %v1372
    %v1428 = vunpack.c.l.b16 %v1373
    %v1429 = vunpack.c.l.b16 %v1374
    %v1430 = vunpack.c.l.b16 %v1375
    %v1431 = vunpack.c.l.b16 %v1376
    %v1432 = vunpack.c.l.b16 %v1377
    %v1433 = vunpack.c.l.b16 %v1378
    %v1434 = vunpack.c.l.b16 %v1379
    %v1435 = vunpack.c.l.b16 %v1380
    %v1436 = vunpack.c.l.b16 %v1381
    %v1437 = vpack.c.b16 %v1414, %v1413
    %v1438 = vpack.c.b16 %v1416, %v1415
    %v1439 = vpack.c.b16 %v1418, %v1417
    %v1440 = vpack.c.b16 %v1420, %v1419
    %v1441 = vpack.c.b16 %v1422, %v1421
    %v1442 = vpack.c.b16 %v1424, %v1423
    %v1443 = vpack.c.b16 %v1426, %v1425
    %v1444 = vpack.c.b16 %v1428, %v1427
    %v1445 = vpack.c.b16 %v1430, %v1429
    %v1446 = vpack.c.b16 %v1432, %v1431
    %v1447 = vpack.c.b16 %v1434, %v1433
    %v1448 = vpack.c.b16 %v1436, %v1435
    %vm1461 = vcmask 523264
    %v1463 = vsel %vm1461, %v1357, 0
    %1465 = vmatprep.subr.bf16.mxu0 0
    %1466 = vmatpush1.bf16.msra.mxu0 %v1444
    %1467 = vmatprep.subr.bf16.mxu0 0
    %1468 = vmatpush1.bf16.msra.mxu0 %v1443
    %1469 = vmatprep.subr.bf16.mxu0 0
    %1470 = vmatpush1.bf16.msra.mxu0 %v1442
    %1471 = vmatprep.subr.bf16.mxu0 0
    %1472 = vmatpush1.bf16.msra.mxu0 %v1441
    %1473 = vmatprep.subr.bf16.mxu0 0
    %1474 = vmatpush1.bf16.msra.mxu0 %v1440
    %1475 = vmatprep.subr.bf16.mxu0 0
    %1476 = vmatpush1.bf16.msra.mxu0 %v1439
    %1477 = vmatprep.subr.bf16.mxu0 0
    %1478 = vmatpush1.bf16.msra.mxu0 %v1438
    %1479 = vmatprep.subr.bf16.mxu0 0
    %1480 = vmatpush1.bf16.msra.mxu0 %v1437
    %1481 = vmatprep.subr.bf16.mxu0 0
    %1482 = vmatpush2.bf16.msra.mxu0 0
    %1483 = vmatprep.subr.bf16.mxu0 0
    %1484 = vmatpush2.bf16.msra.mxu0 0
    %1485 = vmatprep.subr.bf16.mxu0 0
    %1486 = vmatpush2.bf16.msra.mxu0 0
    %1487 = vmatprep.subr.bf16.mxu0 0
    %1488 = vmatpush2.bf16.msra.mxu0 0
    %1489 = vmatprep.subr.bf16.mxu0 0
    %1490 = vmatpush2.bf16.msra.mxu0 %v1448
    %1491 = vmatprep.subr.bf16.mxu0 0
    %1492 = vmatpush2.bf16.msra.mxu0 %v1447
    %1493 = vmatprep.subr.bf16.mxu0 0
    %1494 = vmatpush2.bf16.msra.mxu0 %v1446
    %1495 = vmatprep.subr.bf16.mxu0 0
    %1496 = vmatpush2.bf16.msra.mxu0 %v1445
    %1497 = vmatprep.mubr.bf16.mxu0 %v1463
    %1498 = vmatmul.mubr.bf16.gmra.mxu0 %v1356
    %v1499 = vpop.f32.mrf.mxu0
    %v1500 = vadd.f32 %v1387, %v1499
    %v1501 = vpop.f32.mrf.mxu0
    %v1502 = vpop.f32.mrf.mxu0
    %v1503 = vpop.f32.mrf.mxu0
    %1504 = vdwg.mxu0
    %vm1505 = vcmp.gt.f32.partialorder %v1500, 0.0
    %v1506 = vmin.f32 %v1500, 0.0
    %v1507 = vmul.f32 %v1506, 1.442695
    %v1508 = vpow.pop %v1507
    %v1509 = vsub.f32 %v1508, 1.0
    %v1510 = vsel %vm1505, %v1500, %v1509
    %v1511 = vpack.c.bf16 %v1510, %v1510
    %v1512 = vld [vmem:[%s8] sm:$0xf]
    %v1513 = vld [vmem:[%s8 + $0x4] sm:$0xf]
    %v1514 = vld [vmem:[%s8 + $0x8] sm:$0xf]
    %v1515 = vld [vmem:[%s8 + $0xc] sm:$0xf]
    %v1516 = vld [vmem:[%s8 + $0x10] sm:$0xf]
    %v1517 = vld [vmem:[%s8 + $0x14] sm:$0xf]
    %v1518 = vld [vmem:[%s8 + $0x18] sm:$0xf]
    %v1519 = vld [vmem:[%s8 + $0x1c] sm:$0xf]
    %v1520 = vld [vmem:[%s8 + $0x20] sm:$0xf]
    %v1521 = vld [vmem:[%s8 + $0x24] sm:$0xf]
    %v1522 = vld [vmem:[%s8 + $0x28] sm:$0xf]
    %v1523 = vld [vmem:[%s8 + $0x2c] sm:$0xf]
    %v1524 = vld [vmem:[%s8 + $0x30] sm:$0xf]
    %v1525 = vld [vmem:[%s8 + $0x34] sm:$0xf]
    %v1526 = vld [vmem:[%s8 + $0x38] sm:$0xf]
    %v1527 = vld [vmem:[%s8 + $0x3c] sm:$0xf]
    %v1528 = vld [vmem:[%s9] sm:$0x1]
    %v1530 = vlaneseq
    %v1531 = vshrl.u32 %v1530, 7
    %v1532 = vsub.s32 0, %v1531
    %v1533 = vrot.slane %v1528, %v1532
    %v1551 = vunpack.c.l.b16 %v1512
    %v1552 = vunpack.c.l.b16 %v1513
    %v1553 = vunpack.c.l.b16 %v1514
    %v1554 = vunpack.c.l.b16 %v1515
    %v1555 = vunpack.c.l.b16 %v1516
    %v1556 = vunpack.c.l.b16 %v1517
    %v1557 = vunpack.c.l.b16 %v1518
    %v1558 = vunpack.c.l.b16 %v1519
    %v1559 = vunpack.c.l.b16 %v1520
    %v1560 = vunpack.c.l.b16 %v1521
    %v1561 = vunpack.c.l.b16 %v1522
    %v1562 = vunpack.c.l.b16 %v1523
    %v1563 = vunpack.c.l.b16 %v1524
    %v1564 = vunpack.c.l.b16 %v1525
    %v1565 = vunpack.c.l.b16 %v1526
    %v1566 = vunpack.c.l.b16 %v1527
    %v1567 = vpack.c.b16 %v1552, %v1551
    %v1568 = vpack.c.b16 %v1554, %v1553
    %v1569 = vpack.c.b16 %v1556, %v1555
    %v1570 = vpack.c.b16 %v1558, %v1557
    %v1571 = vpack.c.b16 %v1560, %v1559
    %v1572 = vpack.c.b16 %v1562, %v1561
    %v1573 = vpack.c.b16 %v1564, %v1563
    %v1574 = vpack.c.b16 %v1566, %v1565
    %1583 = vmatprep.subr.bf16.mxu0 0
    %1584 = vmatpush1.bf16.msra.mxu0 %v1574
    %1585 = vmatprep.subr.bf16.mxu0 0
    %1586 = vmatpush1.bf16.msra.mxu0 %v1573
    %1587 = vmatprep.subr.bf16.mxu0 0
    %1588 = vmatpush1.bf16.msra.mxu0 %v1572
    %1589 = vmatprep.subr.bf16.mxu0 0
    %1590 = vmatpush1.bf16.msra.mxu0 %v1571
    %1591 = vmatprep.subr.bf16.mxu0 0
    %1592 = vmatpush1.bf16.msra.mxu0 %v1570
    %1593 = vmatprep.subr.bf16.mxu0 0
    %1594 = vmatpush1.bf16.msra.mxu0 %v1569
    %1595 = vmatprep.subr.bf16.mxu0 0
    %1596 = vmatpush1.bf16.msra.mxu0 %v1568
    %1597 = vmatprep.subr.bf16.mxu0 0
    %1598 = vmatpush1.bf16.msra.mxu0 %v1567
    %1599 = vmatprep.subr.bf16.mxu0 0
    %1600 = vmatpush2.bf16.msra.mxu0 0
    %1601 = vmatprep.subr.bf16.mxu0 0
    %1602 = vmatpush2.bf16.msra.mxu0 0
    %1603 = vmatprep.subr.bf16.mxu0 0
    %1604 = vmatpush2.bf16.msra.mxu0 0
    %1605 = vmatprep.subr.bf16.mxu0 0
    %1606 = vmatpush2.bf16.msra.mxu0 0
    %1607 = vmatprep.subr.bf16.mxu0 0
    %1608 = vmatpush2.bf16.msra.mxu0 0
    %1609 = vmatprep.subr.bf16.mxu0 0
    %1610 = vmatpush2.bf16.msra.mxu0 0
    %1611 = vmatprep.subr.bf16.mxu0 0
    %1612 = vmatpush2.bf16.msra.mxu0 0
    %1613 = vmatprep.subr.bf16.mxu0 0
    %1614 = vmatpush2.bf16.msra.mxu0 0
    %1615 = vmatprep.mubr.bf16.mxu0 0
    %1616 = vmatmul.mubr.bf16.gmra.mxu0 %v1511
    %v1617 = vpop.f32.mrf.mxu0
    %v1618 = vadd.f32 %v1533, %v1617
    %v1619 = vpop.f32.mrf.mxu0
    %v1620 = vpop.f32.mrf.mxu0
    %v1621 = vpop.f32.mrf.mxu0
    %1622 = vdwg.mxu0
    %vm1623 = vcmp.gt.f32.partialorder %v1618, 0.0
    %v1624 = vmin.f32 %v1618, 0.0
    %v1625 = vmul.f32 %v1624, 1.442695
    %v1626 = vpow.pop %v1625
    %v1627 = vsub.f32 %v1626, 1.0
    %v1628 = vsel %vm1623, %v1618, %v1627
    %v1629 = vpack.c.bf16 %v1628, %v1628
    %v1630 = vld [vmem:[%s10] sm:$0xf]
    %v1631 = vld [vmem:[%s10 + $0x4] sm:$0xf]
    %v1632 = vld [vmem:[%s10 + $0x8] sm:$0xf]
    %v1633 = vld [vmem:[%s10 + $0xc] sm:$0xf]
    %v1634 = vld [vmem:[%s10 + $0x10] sm:$0xf]
    %v1635 = vld [vmem:[%s10 + $0x14] sm:$0xf]
    %v1636 = vld [vmem:[%s10 + $0x18] sm:$0xf]
    %v1637 = vld [vmem:[%s10 + $0x1c] sm:$0xf]
    %v1638 = vld [vmem:[%s11] sm:$0x1]
    %v1640 = vlaneseq
    %v1641 = vshrl.u32 %v1640, 7
    %v1642 = vsub.s32 0, %v1641
    %v1643 = vrot.slane %v1638, %v1642
    %v1653 = vunpack.c.l.b16 %v1630
    %v1654 = vunpack.c.l.b16 %v1631
    %v1655 = vunpack.c.l.b16 %v1632
    %v1656 = vunpack.c.l.b16 %v1633
    %v1657 = vunpack.c.l.b16 %v1634
    %v1658 = vunpack.c.l.b16 %v1635
    %v1659 = vunpack.c.l.b16 %v1636
    %v1660 = vunpack.c.l.b16 %v1637
    %v1661 = vpack.c.b16 %v1654, %v1653
    %v1662 = vpack.c.b16 %v1656, %v1655
    %v1663 = vpack.c.b16 %v1658, %v1657
    %v1664 = vpack.c.b16 %v1660, %v1659
    %v1670 = vsel %vm1461, %v1629, 0
    %1672 = vmatprep.subr.bf16.mxu0 0
    %1673 = vmatpush1.bf16.msra.mxu0 0
    %1674 = vmatprep.subr.bf16.mxu0 0
    %1675 = vmatpush1.bf16.msra.mxu0 0
    %1676 = vmatprep.subr.bf16.mxu0 0
    %1677 = vmatpush1.bf16.msra.mxu0 0
    %1678 = vmatprep.subr.bf16.mxu0 0
    %1679 = vmatpush1.bf16.msra.mxu0 0
    %1680 = vmatprep.subr.bf16.mxu0 0
    %1681 = vmatpush1.bf16.msra.mxu0 %v1664
    %1682 = vmatprep.subr.bf16.mxu0 0
    %1683 = vmatpush1.bf16.msra.mxu0 %v1663
    %1684 = vmatprep.subr.bf16.mxu0 0
    %1685 = vmatpush1.bf16.msra.mxu0 %v1662
    %1686 = vmatprep.subr.bf16.mxu0 0
    %1687 = vmatpush1.bf16.msra.mxu0 %v1661
    %1688 = vmatprep.subr.bf16.mxu0 0
    %1689 = vmatpush2.bf16.msra.mxu0 0
    %1690 = vmatprep.subr.bf16.mxu0 0
    %1691 = vmatpush2.bf16.msra.mxu0 0
    %1692 = vmatprep.subr.bf16.mxu0 0
    %1693 = vmatpush2.bf16.msra.mxu0 0
    %1694 = vmatprep.subr.bf16.mxu0 0
    %1695 = vmatpush2.bf16.msra.mxu0 0
    %1696 = vmatprep.subr.bf16.mxu0 0
    %1697 = vmatpush2.bf16.msra.mxu0 0
    %1698 = vmatprep.subr.bf16.mxu0 0
    %1699 = vmatpush2.bf16.msra.mxu0 0
    %1700 = vmatprep.subr.bf16.mxu0 0
    %1701 = vmatpush2.bf16.msra.mxu0 0
    %1702 = vmatprep.subr.bf16.mxu0 0
    %1703 = vmatpush2.bf16.msra.mxu0 0
    %1704 = vmatprep.mubr.bf16.mxu0 0
    %1705 = vmatmul.mubr.bf16.gmra.mxu0 %v1670
    %v1706 = vpop.f32.mrf.mxu0
    %v1707 = vadd.f32 %v1643, %v1706
    %v1708 = vpop.f32.mrf.mxu0
    %v1709 = vpop.f32.mrf.mxu0
    %v1710 = vpop.f32.mrf.mxu0
    %1711 = vdwg.mxu0
    %v1712 = vld [vmem:[%s1] sm:$0xff]
    %v1713 = vmul.f32 %v1707, 0.5
    %v1714 = vmul.f32 %v1713, 1.442695
    %v1715 = vpow.pop %v1714
    %1717 = vrot.lane.b32.xlu0 %v1715, 96
    %v1718 = vpop.permute.xlu0 %1717
    %v1720 = vmul.f32 %v1712, %v1718
    %v1721 = vadd.f32 %v1707, %v1720
    %v1722 = vpack.c.bf16 %v1721, %v1721
    %v1723 = vld [vmem:[%s12] sm:$0xff]
    %v1724 = vld [vmem:[%s12 + $0x8] sm:$0xff]
    %v1725 = vld [vmem:[%s12 + $0x10] sm:$0xff]
    %v1726 = vld [vmem:[%s12 + $0x18] sm:$0xff]
    %v1727 = vld [vmem:[%s13] sm:$0x3]
    %v1729 = vlaneseq
    %v1730 = vshrl.u32 %v1729, 7
    %v1731 = vsub.s32 0, %v1730
    %v1732 = vrot.slane %v1727, %v1731
    %v1733 = vlaneseq
    %v1734 = vshrl.u32 %v1733, 7
    %v1735 = vsub.s32 1, %v1734
    %v1736 = vrot.slane %v1727, %v1735
    %v1743 = vunpack.c.l.b16 %v1723
    %v1744 = vunpack.c.h.b16 %v1723
    %v1745 = vunpack.c.l.b16 %v1724
    %v1746 = vunpack.c.h.b16 %v1724
    %v1747 = vunpack.c.l.b16 %v1725
    %v1748 = vunpack.c.h.b16 %v1725
    %v1749 = vunpack.c.l.b16 %v1726
    %v1750 = vunpack.c.h.b16 %v1726
    %v1751 = vpack.c.b16 %v1745, %v1743
    %v1752 = vpack.c.b16 %v1746, %v1744
    %v1753 = vpack.c.b16 %v1749, %v1747
    %v1754 = vpack.c.b16 %v1750, %v1748
    %vm1759 = vcmask 261120
    %v1761 = vsel %vm1759, %v1722, 0
    %1763 = vmatprep.subr.bf16.mxu0 0
    %1764 = vmatpush1.bf16.msra.mxu0 0
    %1765 = vmatprep.subr.bf16.mxu0 0
    %1766 = vmatpush1.bf16.msra.mxu0 0
    %1767 = vmatprep.subr.bf16.mxu0 0
    %1768 = vmatpush1.bf16.msra.mxu0 0
    %1769 = vmatprep.subr.bf16.mxu0 0
    %1770 = vmatpush1.bf16.msra.mxu0 0
    %1771 = vmatprep.subr.bf16.mxu0 0
    %1772 = vmatpush1.bf16.msra.mxu0 0
    %1773 = vmatprep.subr.bf16.mxu0 0
    %1774 = vmatpush1.bf16.msra.mxu0 0
    %1775 = vmatprep.subr.bf16.mxu0 %v1754
    %1776 = vmatpush1.bf16.msra.mxu0 %v1753
    %1777 = vmatprep.subr.bf16.mxu0 %v1752
    %1778 = vmatpush1.bf16.msra.mxu0 %v1751
    %1779 = vmatprep.subr.bf16.mxu0 0
    %1780 = vmatpush2.bf16.msra.mxu0 0
    %1781 = vmatprep.subr.bf16.mxu0 0
    %1782 = vmatpush2.bf16.msra.mxu0 0
    %1783 = vmatprep.subr.bf16.mxu0 0
    %1784 = vmatpush2.bf16.msra.mxu0 0
    %1785 = vmatprep.subr.bf16.mxu0 0
    %1786 = vmatpush2.bf16.msra.mxu0 0
    %1787 = vmatprep.subr.bf16.mxu0 0
    %1788 = vmatpush2.bf16.msra.mxu0 0
    %1789 = vmatprep.subr.bf16.mxu0 0
    %1790 = vmatpush2.bf16.msra.mxu0 0
    %1791 = vmatprep.subr.bf16.mxu0 0
    %1792 = vmatpush2.bf16.msra.mxu0 0
    %1793 = vmatprep.subr.bf16.mxu0 0
    %1794 = vmatpush2.bf16.msra.mxu0 0
    %1795 = vmatprep.mubr.bf16.mxu0 0
    %1796 = vmatmul.mubr.bf16.gmra.mxu0 %v1761
    %v1797 = vpop.f32.mrf.mxu0
    %v1798 = vadd.f32 %v1732, %v1797
    %v1799 = vpop.f32.mrf.mxu0
    %v1800 = vadd.f32 %v1736, %v1799
    %v1801 = vpop.f32.mrf.mxu0
    %v1802 = vpop.f32.mrf.mxu0
    %1803 = vdwg.mxu0
    %vm1804 = vcmp.gt.f32.partialorder %v1798, 0.0
    %vm1805 = vcmp.gt.f32.partialorder %v1800, 0.0
    %v1806 = vmin.f32 %v1798, 0.0
    %v1807 = vmin.f32 %v1800, 0.0
    %v1808 = vmul.f32 %v1806, 1.442695
    %v1809 = vpow.pop %v1808
    %v1810 = vmul.f32 %v1807, 1.442695
    %v1811 = vpow.pop %v1810
    %v1812 = vsub.f32 %v1809, 1.0
    %v1813 = vsub.f32 %v1811, 1.0
    %v1814 = vsel %vm1804, %v1798, %v1812
    %v1815 = vsel %vm1805, %v1800, %v1813
    %v1816 = vpack.c.bf16 %v1814, %v1814
    %v1817 = vpack.c.bf16 %v1815, %v1815
    %v1818 = vld [vmem:[%s14] sm:$0xff]
    %v1819 = vld [vmem:[%s14 + $0x8] sm:$0xff]
    %v1820 = vld [vmem:[%s14 + $0x10] sm:$0xff]
    %v1821 = vld [vmem:[%s14 + $0x18] sm:$0xff]
    %v1822 = vld [vmem:[%s14 + $0x20] sm:$0xff]
    %v1823 = vld [vmem:[%s14 + $0x28] sm:$0xff]
    %v1824 = vld [vmem:[%s14 + $0x30] sm:$0xff]
    %v1825 = vld [vmem:[%s14 + $0x38] sm:$0xff]
    %v1826 = vld [vmem:[%s14 + $0x40] sm:$0xff]
    %v1827 = vld [vmem:[%s14 + $0x48] sm:$0xff]
    %v1828 = vld [vmem:[%s14 + $0x50] sm:$0xff]
    %v1829 = vld [vmem:[%s14 + $0x58] sm:$0xff]
    %v1830 = vld [vmem:[%s14 + $0x60] sm:$0xff]
    %v1831 = vld [vmem:[%s14 + $0x68] sm:$0xff]
    %v1832 = vld [vmem:[%s14 + $0x70] sm:$0xff]
    %v1833 = vld [vmem:[%s14 + $0x78] sm:$0xff]
    %v1834 = vld [vmem:[%s14 + $0x80] sm:$0xff]
    %v1835 = vld [vmem:[%s14 + $0x88] sm:$0xff]
    %v1836 = vld [vmem:[%s14 + $0x90] sm:$0xff]
    %v1837 = vld [vmem:[%s14 + $0x98] sm:$0xff]
    %v1838 = vld [vmem:[%s14 + $0xa0] sm:$0xff]
    %v1839 = vld [vmem:[%s14 + $0xa8] sm:$0xff]
    %v1840 = vld [vmem:[%s14 + $0xb0] sm:$0xff]
    %v1841 = vld [vmem:[%s14 + $0xb8] sm:$0xff]
    %v1842 = vld [vmem:[%s14 + $0xc0] sm:$0xff]
    %v1843 = vld [vmem:[%s14 + $0xc8] sm:$0xff]
    %v1844 = vld [vmem:[%s14 + $0xd0] sm:$0xff]
    %v1845 = vld [vmem:[%s14 + $0xd8] sm:$0xff]
    %v1846 = vld [vmem:[%s14 + $0xe0] sm:$0xff]
    %v1847 = vld [vmem:[%s14 + $0xe8] sm:$0xff]
    %v1848 = vld [vmem:[%s14 + $0xf0] sm:$0xff]
    %v1849 = vld [vmem:[%s14 + $0xf8] sm:$0xff]
    %v1850 = vld [vmem:[%s15] sm:$0x3]
    %v1852 = vlaneseq
    %v1853 = vshrl.u32 %v1852, 7
    %v1854 = vsub.s32 0, %v1853
    %v1855 = vrot.slane %v1850, %v1854
    %v1856 = vlaneseq
    %v1857 = vshrl.u32 %v1856, 7
    %v1858 = vsub.s32 1, %v1857
    %v1859 = vrot.slane %v1850, %v1858
    %v1894 = vunpack.c.l.b16 %v1818
    %v1895 = vunpack.c.h.b16 %v1818
    %v1896 = vunpack.c.l.b16 %v1819
    %v1897 = vunpack.c.h.b16 %v1819
    %v1898 = vunpack.c.l.b16 %v1820
    %v1899 = vunpack.c.h.b16 %v1820
    %v1900 = vunpack.c.l.b16 %v1821
    %v1901 = vunpack.c.h.b16 %v1821
    %v1902 = vunpack.c.l.b16 %v1822
    %v1903 = vunpack.c.h.b16 %v1822
    %v1904 = vunpack.c.l.b16 %v1823
    %v1905 = vunpack.c.h.b16 %v1823
    %v1906 = vunpack.c.l.b16 %v1824
    %v1907 = vunpack.c.h.b16 %v1824
    %v1908 = vunpack.c.l.b16 %v1825
    %v1909 = vunpack.c.h.b16 %v1825
    %v1910 = vunpack.c.l.b16 %v1826
    %v1911 = vunpack.c.h.b16 %v1826
    %v1912 = vunpack.c.l.b16 %v1827
    %v1913 = vunpack.c.h.b16 %v1827
    %v1914 = vunpack.c.l.b16 %v1828
    %v1915 = vunpack.c.h.b16 %v1828
    %v1916 = vunpack.c.l.b16 %v1829
    %v1917 = vunpack.c.h.b16 %v1829
    %v1918 = vunpack.c.l.b16 %v1830
    %v1919 = vunpack.c.h.b16 %v1830
    %v1920 = vunpack.c.l.b16 %v1831
    %v1921 = vunpack.c.h.b16 %v1831
    %v1922 = vunpack.c.l.b16 %v1832
    %v1923 = vunpack.c.h.b16 %v1832
    %v1924 = vunpack.c.l.b16 %v1833
    %v1925 = vunpack.c.h.b16 %v1833
    %v1926 = vunpack.c.l.b16 %v1834
    %v1927 = vunpack.c.h.b16 %v1834
    %v1928 = vunpack.c.l.b16 %v1835
    %v1929 = vunpack.c.h.b16 %v1835
    %v1930 = vunpack.c.l.b16 %v1836
    %v1931 = vunpack.c.h.b16 %v1836
    %v1932 = vunpack.c.l.b16 %v1837
    %v1933 = vunpack.c.h.b16 %v1837
    %v1934 = vunpack.c.l.b16 %v1838
    %v1935 = vunpack.c.h.b16 %v1838
    %v1936 = vunpack.c.l.b16 %v1839
    %v1937 = vunpack.c.h.b16 %v1839
    %v1938 = vunpack.c.l.b16 %v1840
    %v1939 = vunpack.c.h.b16 %v1840
    %v1940 = vunpack.c.l.b16 %v1841
    %v1941 = vunpack.c.h.b16 %v1841
    %v1942 = vunpack.c.l.b16 %v1842
    %v1943 = vunpack.c.h.b16 %v1842
    %v1944 = vunpack.c.l.b16 %v1843
    %v1945 = vunpack.c.h.b16 %v1843
    %v1946 = vunpack.c.l.b16 %v1844
    %v1947 = vunpack.c.h.b16 %v1844
    %v1948 = vunpack.c.l.b16 %v1845
    %v1949 = vunpack.c.h.b16 %v1845
    %v1950 = vunpack.c.l.b16 %v1846
    %v1951 = vunpack.c.h.b16 %v1846
    %v1952 = vunpack.c.l.b16 %v1847
    %v1953 = vunpack.c.h.b16 %v1847
    %v1954 = vunpack.c.l.b16 %v1848
    %v1955 = vunpack.c.h.b16 %v1848
    %v1956 = vunpack.c.l.b16 %v1849
    %v1957 = vunpack.c.h.b16 %v1849
    %v1958 = vpack.c.b16 %v1896, %v1894
    %v1959 = vpack.c.b16 %v1897, %v1895
    %v1960 = vpack.c.b16 %v1900, %v1898
    %v1961 = vpack.c.b16 %v1901, %v1899
    %v1962 = vpack.c.b16 %v1904, %v1902
    %v1963 = vpack.c.b16 %v1905, %v1903
    %v1964 = vpack.c.b16 %v1908, %v1906
    %v1965 = vpack.c.b16 %v1909, %v1907
    %v1966 = vpack.c.b16 %v1912, %v1910
    %v1967 = vpack.c.b16 %v1913, %v1911
    %v1968 = vpack.c.b16 %v1916, %v1914
    %v1969 = vpack.c.b16 %v1917, %v1915
    %v1970 = vpack.c.b16 %v1920, %v1918
    %v1971 = vpack.c.b16 %v1921, %v1919
    %v1972 = vpack.c.b16 %v1924, %v1922
    %v1973 = vpack.c.b16 %v1925, %v1923
    %v1974 = vpack.c.b16 %v1928, %v1926
    %v1975 = vpack.c.b16 %v1929, %v1927
    %v1976 = vpack.c.b16 %v1932, %v1930
    %v1977 = vpack.c.b16 %v1933, %v1931
    %v1978 = vpack.c.b16 %v1936, %v1934
    %v1979 = vpack.c.b16 %v1937, %v1935
    %v1980 = vpack.c.b16 %v1940, %v1938
    %v1981 = vpack.c.b16 %v1941, %v1939
    %v1982 = vpack.c.b16 %v1944, %v1942
    %v1983 = vpack.c.b16 %v1945, %v1943
    %v1984 = vpack.c.b16 %v1948, %v1946
    %v1985 = vpack.c.b16 %v1949, %v1947
    %v1986 = vpack.c.b16 %v1952, %v1950
    %v1987 = vpack.c.b16 %v1953, %v1951
    %v1988 = vpack.c.b16 %v1956, %v1954
    %v1989 = vpack.c.b16 %v1957, %v1955
    %2022 = vmatprep.subr.bf16.mxu0 %v1973
    %2023 = vmatpush1.bf16.msra.mxu0 %v1972
    %2024 = vmatprep.subr.bf16.mxu0 %v1971
    %2025 = vmatpush1.bf16.msra.mxu0 %v1970
    %2026 = vmatprep.subr.bf16.mxu0 %v1969
    %2027 = vmatpush1.bf16.msra.mxu0 %v1968
    %2028 = vmatprep.subr.bf16.mxu0 %v1967
    %2029 = vmatpush1.bf16.msra.mxu0 %v1966
    %2030 = vmatprep.subr.bf16.mxu0 %v1965
    %2031 = vmatpush1.bf16.msra.mxu0 %v1964
    %2032 = vmatprep.subr.bf16.mxu0 %v1963
    %2033 = vmatpush1.bf16.msra.mxu0 %v1962
    %2034 = vmatprep.subr.bf16.mxu0 %v1961
    %2035 = vmatpush1.bf16.msra.mxu0 %v1960
    %2036 = vmatprep.subr.bf16.mxu0 %v1959
    %2037 = vmatpush1.bf16.msra.mxu0 %v1958
    %2038 = vmatprep.subr.bf16.mxu0 %v1989
    %2039 = vmatpush2.bf16.msra.mxu0 %v1988
    %2040 = vmatprep.subr.bf16.mxu0 %v1987
    %2041 = vmatpush2.bf16.msra.mxu0 %v1986
    %2042 = vmatprep.subr.bf16.mxu0 %v1985
    %2043 = vmatpush2.bf16.msra.mxu0 %v1984
    %2044 = vmatprep.subr.bf16.mxu0 %v1983
    %2045 = vmatpush2.bf16.msra.mxu0 %v1982
    %2046 = vmatprep.subr.bf16.mxu0 %v1981
    %2047 = vmatpush2.bf16.msra.mxu0 %v1980
    %2048 = vmatprep.subr.bf16.mxu0 %v1979
    %2049 = vmatpush2.bf16.msra.mxu0 %v1978
    %2050 = vmatprep.subr.bf16.mxu0 %v1977
    %2051 = vmatpush2.bf16.msra.mxu0 %v1976
    %2052 = vmatprep.subr.bf16.mxu0 %v1975
    %2053 = vmatpush2.bf16.msra.mxu0 %v1974
    %2054 = vmatprep.mubr.bf16.mxu0 %v1817
    %2055 = vmatmul.mubr.bf16.gmra.mxu0 %v1816
    %v2056 = vpop.f32.mrf.mxu0
    %v2057 = vadd.f32 %v1855, %v2056
    %v2058 = vpop.f32.mrf.mxu0
    %v2059 = vadd.f32 %v1859, %v2058
    %v2060 = vpop.f32.mrf.mxu0
    %v2061 = vpop.f32.mrf.mxu0
    %2062 = vdwg.mxu0
    %vm2063 = vcmp.gt.f32.partialorder %v2057, 0.0
    %vm2064 = vcmp.gt.f32.partialorder %v2059, 0.0
    %v2065 = vmin.f32 %v2057, 0.0
    %v2066 = vmin.f32 %v2059, 0.0
    %v2067 = vmul.f32 %v2065, 1.442695
    %v2068 = vpow.pop %v2067
    %v2069 = vmul.f32 %v2066, 1.442695
    %v2070 = vpow.pop %v2069
    %v2071 = vsub.f32 %v2068, 1.0
    %v2072 = vsub.f32 %v2070, 1.0
    %v2073 = vsel %vm2063, %v2057, %v2071
    %v2074 = vsel %vm2064, %v2059, %v2072
    %v2075 = vpack.c.bf16 %v2073, %v2073
    %v2076 = vpack.c.bf16 %v2074, %v2074
    %v2077 = vld [vmem:[%s16] sm:$0xf]
    %v2078 = vld [vmem:[%s16 + $0x4] sm:$0xf]
    %v2079 = vld [vmem:[%s16 + $0x8] sm:$0xf]
    %v2080 = vld [vmem:[%s16 + $0xc] sm:$0xf]
    %v2081 = vld [vmem:[%s16 + $0x10] sm:$0xf]
    %v2082 = vld [vmem:[%s16 + $0x14] sm:$0xf]
    %v2083 = vld [vmem:[%s16 + $0x18] sm:$0xf]
    %v2084 = vld [vmem:[%s16 + $0x1c] sm:$0xf]
    %v2085 = vld [vmem:[%s16 + $0x20] sm:$0xf]
    %v2086 = vld [vmem:[%s16 + $0x24] sm:$0xf]
    %v2087 = vld [vmem:[%s16 + $0x28] sm:$0xf]
    %v2088 = vld [vmem:[%s16 + $0x2c] sm:$0xf]
    %v2089 = vld [vmem:[%s16 + $0x30] sm:$0xf]
    %v2090 = vld [vmem:[%s16 + $0x34] sm:$0xf]
    %v2091 = vld [vmem:[%s16 + $0x38] sm:$0xf]
    %v2092 = vld [vmem:[%s16 + $0x3c] sm:$0xf]
    %v2093 = vld [vmem:[%s16 + $0x40] sm:$0xf]
    %v2094 = vld [vmem:[%s16 + $0x44] sm:$0xf]
    %v2095 = vld [vmem:[%s16 + $0x48] sm:$0xf]
    %v2096 = vld [vmem:[%s16 + $0x4c] sm:$0xf]
    %v2097 = vld [vmem:[%s16 + $0x50] sm:$0xf]
    %v2098 = vld [vmem:[%s16 + $0x54] sm:$0xf]
    %v2099 = vld [vmem:[%s16 + $0x58] sm:$0xf]
    %v2100 = vld [vmem:[%s16 + $0x5c] sm:$0xf]
    %v2101 = vld [vmem:[%s17] sm:$0x1]
    %v2103 = vlaneseq
    %v2104 = vshrl.u32 %v2103, 7
    %v2105 = vsub.s32 0, %v2104
    %v2106 = vrot.slane %v2101, %v2105
    %v2132 = vunpack.c.l.b16 %v2077
    %v2133 = vunpack.c.l.b16 %v2078
    %v2134 = vunpack.c.l.b16 %v2079
    %v2135 = vunpack.c.l.b16 %v2080
    %v2136 = vunpack.c.l.b16 %v2081
    %v2137 = vunpack.c.l.b16 %v2082
    %v2138 = vunpack.c.l.b16 %v2083
    %v2139 = vunpack.c.l.b16 %v2084
    %v2140 = vunpack.c.l.b16 %v2085
    %v2141 = vunpack.c.l.b16 %v2086
    %v2142 = vunpack.c.l.b16 %v2087
    %v2143 = vunpack.c.l.b16 %v2088
    %v2144 = vunpack.c.l.b16 %v2089
    %v2145 = vunpack.c.l.b16 %v2090
    %v2146 = vunpack.c.l.b16 %v2091
    %v2147 = vunpack.c.l.b16 %v2092
    %v2148 = vunpack.c.l.b16 %v2093
    %v2149 = vunpack.c.l.b16 %v2094
    %v2150 = vunpack.c.l.b16 %v2095
    %v2151 = vunpack.c.l.b16 %v2096
    %v2152 = vunpack.c.l.b16 %v2097
    %v2153 = vunpack.c.l.b16 %v2098
    %v2154 = vunpack.c.l.b16 %v2099
    %v2155 = vunpack.c.l.b16 %v2100
    %v2156 = vpack.c.b16 %v2133, %v2132
    %v2157 = vpack.c.b16 %v2135, %v2134
    %v2158 = vpack.c.b16 %v2137, %v2136
    %v2159 = vpack.c.b16 %v2139, %v2138
    %v2160 = vpack.c.b16 %v2141, %v2140
    %v2161 = vpack.c.b16 %v2143, %v2142
    %v2162 = vpack.c.b16 %v2145, %v2144
    %v2163 = vpack.c.b16 %v2147, %v2146
    %v2164 = vpack.c.b16 %v2149, %v2148
    %v2165 = vpack.c.b16 %v2151, %v2150
    %v2166 = vpack.c.b16 %v2153, %v2152
    %v2167 = vpack.c.b16 %v2155, %v2154
    %v2181 = vsel %vm1461, %v2076, 0
    %2183 = vmatprep.subr.bf16.mxu0 0
    %2184 = vmatpush1.bf16.msra.mxu0 %v2163
    %2185 = vmatprep.subr.bf16.mxu0 0
    %2186 = vmatpush1.bf16.msra.mxu0 %v2162
    %2187 = vmatprep.subr.bf16.mxu0 0
    %2188 = vmatpush1.bf16.msra.mxu0 %v2161
    %2189 = vmatprep.subr.bf16.mxu0 0
    %2190 = vmatpush1.bf16.msra.mxu0 %v2160
    %2191 = vmatprep.subr.bf16.mxu0 0
    %2192 = vmatpush1.bf16.msra.mxu0 %v2159
    %2193 = vmatprep.subr.bf16.mxu0 0
    %2194 = vmatpush1.bf16.msra.mxu0 %v2158
    %2195 = vmatprep.subr.bf16.mxu0 0
    %2196 = vmatpush1.bf16.msra.mxu0 %v2157
    %2197 = vmatprep.subr.bf16.mxu0 0
    %2198 = vmatpush1.bf16.msra.mxu0 %v2156
    %2199 = vmatprep.subr.bf16.mxu0 0
    %2200 = vmatpush2.bf16.msra.mxu0 0
    %2201 = vmatprep.subr.bf16.mxu0 0
    %2202 = vmatpush2.bf16.msra.mxu0 0
    %2203 = vmatprep.subr.bf16.mxu0 0
    %2204 = vmatpush2.bf16.msra.mxu0 0
    %2205 = vmatprep.subr.bf16.mxu0 0
    %2206 = vmatpush2.bf16.msra.mxu0 0
    %2207 = vmatprep.subr.bf16.mxu0 0
    %2208 = vmatpush2.bf16.msra.mxu0 %v2167
    %2209 = vmatprep.subr.bf16.mxu0 0
    %2210 = vmatpush2.bf16.msra.mxu0 %v2166
    %2211 = vmatprep.subr.bf16.mxu0 0
    %2212 = vmatpush2.bf16.msra.mxu0 %v2165
    %2213 = vmatprep.subr.bf16.mxu0 0
    %2214 = vmatpush2.bf16.msra.mxu0 %v2164
    %2215 = vmatprep.mubr.bf16.mxu0 %v2181
    %2216 = vmatmul.mubr.bf16.gmra.mxu0 %v2075
    %v2217 = vpop.f32.mrf.mxu0
    %v2218 = vadd.f32 %v2106, %v2217
    %v2219 = vpop.f32.mrf.mxu0
    %v2220 = vpop.f32.mrf.mxu0
    %v2221 = vpop.f32.mrf.mxu0
    %2222 = vdwg.mxu0
    %vm2223 = vcmp.gt.f32.partialorder %v2218, 0.0
    %v2224 = vmin.f32 %v2218, 0.0
    %v2225 = vmul.f32 %v2224, 1.442695
    %v2226 = vpow.pop %v2225
    %v2227 = vsub.f32 %v2226, 1.0
    %v2228 = vsel %vm2223, %v2218, %v2227
    %v2229 = vpack.c.bf16 %v2228, %v2228
    %v2230 = vld [vmem:[%s18] sm:$0xff]
    %v2231 = vld [vmem:[%s18 + $0x8] sm:$0xff]
    %v2232 = vld [vmem:[%s18 + $0x10] sm:$0xff]
    %v2233 = vld [vmem:[%s18 + $0x18] sm:$0xff]
    %v2234 = vld [vmem:[%s18 + $0x20] sm:$0xff]
    %v2235 = vld [vmem:[%s18 + $0x28] sm:$0xff]
    %v2236 = vld [vmem:[%s18 + $0x30] sm:$0xff]
    %v2237 = vld [vmem:[%s18 + $0x38] sm:$0xff]
    %v2238 = vld [vmem:[%s18 + $0x40] sm:$0xff]
    %v2239 = vld [vmem:[%s18 + $0x48] sm:$0xff]
    %v2240 = vld [vmem:[%s18 + $0x50] sm:$0xff]
    %v2241 = vld [vmem:[%s18 + $0x58] sm:$0xff]
    %v2242 = vld [vmem:[%s18 + $0x60] sm:$0xff]
    %v2243 = vld [vmem:[%s18 + $0x68] sm:$0xff]
    %v2244 = vld [vmem:[%s18 + $0x70] sm:$0xff]
    %v2245 = vld [vmem:[%s18 + $0x78] sm:$0xff]
    %v2246 = vld [vmem:[%s19] sm:$0x3]
    %v2248 = vlaneseq
    %v2249 = vshrl.u32 %v2248, 7
    %v2250 = vsub.s32 0, %v2249
    %v2251 = vrot.slane %v2246, %v2250
    %v2252 = vlaneseq
    %v2253 = vshrl.u32 %v2252, 7
    %v2254 = vsub.s32 1, %v2253
    %v2255 = vrot.slane %v2246, %v2254
    %v2274 = vunpack.c.l.b16 %v2230
    %v2275 = vunpack.c.h.b16 %v2230
    %v2276 = vunpack.c.l.b16 %v2231
    %v2277 = vunpack.c.h.b16 %v2231
    %v2278 = vunpack.c.l.b16 %v2232
    %v2279 = vunpack.c.h.b16 %v2232
    %v2280 = vunpack.c.l.b16 %v2233
    %v2281 = vunpack.c.h.b16 %v2233
    %v2282 = vunpack.c.l.b16 %v2234
    %v2283 = vunpack.c.h.b16 %v2234
    %v2284 = vunpack.c.l.b16 %v2235
    %v2285 = vunpack.c.h.b16 %v2235
    %v2286 = vunpack.c.l.b16 %v2236
    %v2287 = vunpack.c.h.b16 %v2236
    %v2288 = vunpack.c.l.b16 %v2237
    %v2289 = vunpack.c.h.b16 %v2237
    %v2290 = vunpack.c.l.b16 %v2238
    %v2291 = vunpack.c.h.b16 %v2238
    %v2292 = vunpack.c.l.b16 %v2239
    %v2293 = vunpack.c.h.b16 %v2239
    %v2294 = vunpack.c.l.b16 %v2240
    %v2295 = vunpack.c.h.b16 %v2240
    %v2296 = vunpack.c.l.b16 %v2241
    %v2297 = vunpack.c.h.b16 %v2241
    %v2298 = vunpack.c.l.b16 %v2242
    %v2299 = vunpack.c.h.b16 %v2242
    %v2300 = vunpack.c.l.b16 %v2243
    %v2301 = vunpack.c.h.b16 %v2243
    %v2302 = vunpack.c.l.b16 %v2244
    %v2303 = vunpack.c.h.b16 %v2244
    %v2304 = vunpack.c.l.b16 %v2245
    %v2305 = vunpack.c.h.b16 %v2245
    %v2306 = vpack.c.b16 %v2276, %v2274
    %v2307 = vpack.c.b16 %v2277, %v2275
    %v2308 = vpack.c.b16 %v2280, %v2278
    %v2309 = vpack.c.b16 %v2281, %v2279
    %v2310 = vpack.c.b16 %v2284, %v2282
    %v2311 = vpack.c.b16 %v2285, %v2283
    %v2312 = vpack.c.b16 %v2288, %v2286
    %v2313 = vpack.c.b16 %v2289, %v2287
    %v2314 = vpack.c.b16 %v2292, %v2290
    %v2315 = vpack.c.b16 %v2293, %v2291
    %v2316 = vpack.c.b16 %v2296, %v2294
    %v2317 = vpack.c.b16 %v2297, %v2295
    %v2318 = vpack.c.b16 %v2300, %v2298
    %v2319 = vpack.c.b16 %v2301, %v2299
    %v2320 = vpack.c.b16 %v2304, %v2302
    %v2321 = vpack.c.b16 %v2305, %v2303
    %2338 = vmatprep.subr.bf16.mxu0 %v2321
    %2339 = vmatpush1.bf16.msra.mxu0 %v2320
    %2340 = vmatprep.subr.bf16.mxu0 %v2319
    %2341 = vmatpush1.bf16.msra.mxu0 %v2318
    %2342 = vmatprep.subr.bf16.mxu0 %v2317
    %2343 = vmatpush1.bf16.msra.mxu0 %v2316
    %2344 = vmatprep.subr.bf16.mxu0 %v2315
    %2345 = vmatpush1.bf16.msra.mxu0 %v2314
    %2346 = vmatprep.subr.bf16.mxu0 %v2313
    %2347 = vmatpush1.bf16.msra.mxu0 %v2312
    %2348 = vmatprep.subr.bf16.mxu0 %v2311
    %2349 = vmatpush1.bf16.msra.mxu0 %v2310
    %2350 = vmatprep.subr.bf16.mxu0 %v2309
    %2351 = vmatpush1.bf16.msra.mxu0 %v2308
    %2352 = vmatprep.subr.bf16.mxu0 %v2307
    %2353 = vmatpush1.bf16.msra.mxu0 %v2306
    %2354 = vmatprep.subr.bf16.mxu0 0
    %2355 = vmatpush2.bf16.msra.mxu0 0
    %2356 = vmatprep.subr.bf16.mxu0 0
    %2357 = vmatpush2.bf16.msra.mxu0 0
    %2358 = vmatprep.subr.bf16.mxu0 0
    %2359 = vmatpush2.bf16.msra.mxu0 0
    %2360 = vmatprep.subr.bf16.mxu0 0
    %2361 = vmatpush2.bf16.msra.mxu0 0
    %2362 = vmatprep.subr.bf16.mxu0 0
    %2363 = vmatpush2.bf16.msra.mxu0 0
    %2364 = vmatprep.subr.bf16.mxu0 0
    %2365 = vmatpush2.bf16.msra.mxu0 0
    %2366 = vmatprep.subr.bf16.mxu0 0
    %2367 = vmatpush2.bf16.msra.mxu0 0
    %2368 = vmatprep.subr.bf16.mxu0 0
    %2369 = vmatpush2.bf16.msra.mxu0 0
    %2370 = vmatprep.mubr.bf16.mxu0 0
    %2371 = vmatmul.mubr.bf16.gmra.mxu0 %v2229
    %v2372 = vpop.f32.mrf.mxu0
    %v2373 = vadd.f32 %v2251, %v2372
    %v2374 = vpop.f32.mrf.mxu0
    %v2375 = vadd.f32 %v2255, %v2374
    %v2376 = vpop.f32.mrf.mxu0
    %v2377 = vpop.f32.mrf.mxu0
    %2378 = vdwg.mxu0
    %vm2379 = vcmp.gt.f32.partialorder %v2373, 0.0
    %vm2380 = vcmp.gt.f32.partialorder %v2375, 0.0
    %v2381 = vmin.f32 %v2373, 0.0
    %v2382 = vmin.f32 %v2375, 0.0
    %v2383 = vmul.f32 %v2381, 1.442695
    %v2384 = vpow.pop %v2383
    %v2385 = vmul.f32 %v2382, 1.442695
    %v2386 = vpow.pop %v2385
    %v2387 = vsub.f32 %v2384, 1.0
    %v2388 = vsub.f32 %v2386, 1.0
    %v2389 = vsel %vm2379, %v2373, %v2387
    %v2390 = vsel %vm2380, %v2375, %v2388
    %2391 = vst [vmem:[%s20] sm:$0xff] %v2389
    %2392 = vst [vmem:[%s20 + $0x8] sm:$0xff] %v2390
    %2393 = vst.msk [vmem:[%s21] sm:$0xff] %vm1461, %v1707
    // Predicated region
    $region86: #{linear_vae_forward.1} parent=1 // pred_check
      _
    $region87: #{linear_vae_forward.1} parent=1 // pred_check_branch
      %2395 = sbr.rel (0) target = $region89
    $region88: #{linear_vae_forward.1} parent=1 // pred_region
      _
    $region89: #{linear_vae_forward.1} parent=1 // pred_fallthru
      _
    // Predicated region
    $region90: #{linear_vae_forward.1} parent=1 // pred_check
      _
    $region91: #{linear_vae_forward.1} parent=1 // pred_check_branch
      %2397 = sbr.rel (0) target = $region93
    $region92: #{linear_vae_forward.1} parent=1 // pred_region
      _
    $region93: #{linear_vae_forward.1} parent=1 // pred_fallthru
      _
    // Predicated region
    $region94: #{linear_vae_forward.1} parent=1 // pred_check
      _
    $region95: #{linear_vae_forward.1} parent=1 // pred_check_branch
      %2399 = sbr.rel (0) target = $region97
    $region96: #{linear_vae_forward.1} parent=1 // pred_region
      _
    $region97: #{linear_vae_forward.1} parent=1 // pred_fallthru
      _
    // Predicated region
    $region98: #{linear_vae_forward.1} parent=1 // pred_check
      _
    $region99: #{linear_vae_forward.1} parent=1 // pred_check_branch
      %2401 = sbr.rel (0) target = $region101
    $region100: #{linear_vae_forward.1} parent=1 // pred_region
      _
    $region101: #{linear_vae_forward.1} parent=1 // pred_fallthru
      _
    %2402 = vsyncpa [#allocation3], 1

</llo_original>
